<compile_context>
chip_gen: v5e
topology: v5e:2x2
jax: 0.10.0
libtpu: 0.0.40
codegen_flags: <defaults>
</compile_context>

<pallas_src>
import math

import jax
import jax.numpy as jnp
from jax.experimental import pallas as pl
from jax.experimental.pallas import tpu as pltpu

NUM_EMBEDDINGS = 50
EMBEDDING_DIM = 64
LSTM_DIM = 32
NUM_LABEL = 5


# ----------------------------------------------------------------------------
# Fused kernel factory (T = d0 = LSTM time = CRF batch, N = d1 = LSTM batch =
# CRF sequence).  All shapes are tiny; every operand is a single full block.
# ----------------------------------------------------------------------------
def _make_ner_kernel(T, N, L, V):
    B, S = T, N
    H = LSTM_DIM

    def kernel(ids_ref, labids_ref, emb_ref, wih_ref, whh_ref, b_ref,
               wfc_ref, bfc_ref, tr_ref, out_ref):
        f32 = jnp.float32

        # ---- embedding gather as a one-hot matmul (stays on the MXU) ----
        ids = ids_ref[...]                                          # (T*N, 1) int32
        vocab_iota = jax.lax.broadcasted_iota(jnp.int32, (T * N, V), 1)
        one_hot = (ids == vocab_iota).astype(f32)                   # (T*N, V)
        x_emb = jnp.dot(one_hot, emb_ref[...],
                        preferred_element_type=f32)                 # (T*N, E)

        # ---- input->hidden gates hoisted off the recurrent critical path ----
        gx = jnp.dot(x_emb, wih_ref[...],
                     preferred_element_type=f32) + b_ref[...]       # (T*N, 128)

        whh = whh_ref[...]                                          # (32, 128) = 4 vregs
        h = jnp.zeros((N, H), f32)
        c = jnp.zeros((N, H), f32)
        hs = []
        for t in range(T):                                          # static unroll (T=4)
            gates = gx[t * N:(t + 1) * N, :] + jnp.dot(
                h, whh, preferred_element_type=f32)                 # (N, 128)
            # torch gate order [i | f | g | o]; one sigmoid over the whole packed
            # vreg + tanh(g) + tanh(c) -> 3 EUP passes per step.
            sig = jax.nn.sigmoid(gates)
            i_g = sig[:, 0:H]
            f_g = sig[:, H:2 * H]
            o_g = sig[:, 3 * H:4 * H]
            g_g = jnp.tanh(gates[:, 2 * H:3 * H])
            c = f_g * c + i_g * g_g
            h = o_g * jnp.tanh(c)
            hs.append(h)

        # ---- deferred FC: one matmul instead of one per time step ----
        hs_all = jnp.concatenate(hs, axis=0)                        # (T*N, 32)
        nodes = jnp.dot(hs_all, wfc_ref[...],
                        preferred_element_type=f32) + bfc_ref[...]  # (T*N, L)

        # ---- CRF path score (label one-hots built in-kernel from ids) ----
        tr = tr_ref[...]                                            # (L, L)
        lab_ids = labids_ref[...]                                   # (B*S, 1) int32
        lbl_iota = jax.lax.broadcasted_iota(jnp.int32, (B * S, L), 1)
        lab = (lab_ids == lbl_iota).astype(f32)                     # (B*S, L)

        em = jnp.sum(nodes * lab, keepdims=True)                    # (1, 1)
        u3 = jnp.dot(lab, tr, preferred_element_type=f32).reshape(B, S, L)
        lab3 = lab.reshape(B, S, L)
        tacc = jnp.zeros((B, L), f32)
        for s in range(S - 1):                                      # off the serial chain
            tacc = tacc + u3[:, s, :] * lab3[:, s + 1, :]
        trans_sc = jnp.sum(tacc, keepdims=True)                     # (1, 1)
        path_total = em + trans_sc                                  # == sum_b path_score_b

        # ---- CRF forward algorithm: logZ_b, VPU/XLU-only per-step update ----
        # logsumexp_i(Z[b,i] + tr[i,j]) computed as
        #   m_b + cmax_j + log( sum_i exp(Z[b,i]-m_b) * exp(tr[i,j]-cmax_j) )
        # i.e. 5 column-wise broadcast MACs instead of a tiny MXU matmul.
        nodes3 = nodes.reshape(B, S, L)
        cmax = jnp.max(tr, axis=0, keepdims=True)                   # (1, L)
        exp_tr = jnp.exp(tr - cmax)                                 # loop-invariant
        tr_rows = [exp_tr[i:i + 1, :] for i in range(L)]            # (1, L) each
        Z = nodes3[:, 0, :]                                         # (B, L)
        for s in range(1, S):                                       # serial, static unroll
            m = jnp.max(Z, axis=-1, keepdims=True)                  # (B, 1)
            p = jnp.exp(Z - m)                                      # (B, L)
            acc = p[:, 0:1] * tr_rows[0]
            for i in range(1, L):
                acc = acc + p[:, i:i + 1] * tr_rows[i]
            Z = jnp.log(acc) + m + cmax + nodes3[:, s, :]
        m = jnp.max(Z, axis=-1, keepdims=True)
        logz = jnp.log(jnp.sum(jnp.exp(Z - m), axis=-1, keepdims=True)) + m
        sum_logz = jnp.sum(logz, keepdims=True)                     # (1, 1)

        # torch's (B,1)+(B,) -> (B,B) broadcast then sum == B*(sum logZ - sum path)
        out_ref[...] = jnp.float32(B) * (sum_logz - path_total)

    return kernel


# ----------------------------------------------------------------------------
# Wrapper: minimal layout plumbing (weight transposes only) + single pallas_call.
# Takes integer label ids; the one-hot is built inside the kernel.
# ----------------------------------------------------------------------------
def test_ner_forward(ids, label_ids, params):
    T, N = ids.shape
    B, S = T, N
    E, H, L = EMBEDDING_DIM, LSTM_DIM, NUM_LABEL
    V = params["emb"].shape[0]

    wih_p = params["w_ih"].T                                     # (E, 4H) = (64, 128)
    whh_p = params["w_hh"].T                                     # (H, 4H) = (32, 128)
    b_p = (params["b_ih"] + params["b_hh"]).reshape(1, 4 * H)    # (1, 128)
    wfc_p = params["w_fc"].T                                     # (H, L) = (32, 5)
    bfc = params["b_fc"].reshape(1, L)                           # (1, 5)

    ids_flat = ids.reshape(T * N, 1).astype(jnp.int32)
    labids_flat = label_ids.reshape(B * S, 1).astype(jnp.int32)

    out = pl.pallas_call(
        _make_ner_kernel(T, N, L, V),
        out_shape=jax.ShapeDtypeStruct((1, 1), jnp.float32),
        grid=(1,),
        in_specs=[
            pl.BlockSpec((T * N, 1), lambda i: (0, 0)),
            pl.BlockSpec((B * S, 1), lambda i: (0, 0)),
            pl.BlockSpec((V, E), lambda i: (0, 0)),
            pl.BlockSpec((E, 4 * H), lambda i: (0, 0)),
            pl.BlockSpec((H, 4 * H), lambda i: (0, 0)),
            pl.BlockSpec((1, 4 * H), lambda i: (0, 0)),
            pl.BlockSpec((H, L), lambda i: (0, 0)),
            pl.BlockSpec((1, L), lambda i: (0, 0)),
            pl.BlockSpec((L, L), lambda i: (0, 0)),
        ],
        out_specs=pl.BlockSpec((1, 1), lambda i: (0, 0)),
        compiler_params=pltpu.CompilerParams(
            dimension_semantics=("arbitrary",)),
    )(ids_flat, labids_flat, params["emb"], wih_p, whh_p, b_p, wfc_p, bfc,
      params["trans"])
    return out[0, 0]


# ----------------------------------------------------------------------------
# Pure-JAX reference mirroring the PyTorch semantics (incl. the literal
# (B,1)+(B,) -> (B,B) broadcast before the final sum).
# ----------------------------------------------------------------------------
def reference_forward(ids, labels, params):
    emb = params["emb"][ids]
    T, N, _ = emb.shape
    H = LSTM_DIM
    h = jnp.zeros((N, H), jnp.float32)
    c = jnp.zeros((N, H), jnp.float32)
    outs = []
    for t in range(T):
        gates = (emb[t] @ params["w_ih"].T + h @ params["w_hh"].T
                 + params["b_ih"] + params["b_hh"])
        i = jax.nn.sigmoid(gates[:, 0:H])
        f = jax.nn.sigmoid(gates[:, H:2 * H])
        g = jnp.tanh(gates[:, 2 * H:3 * H])
        o = jax.nn.sigmoid(gates[:, 3 * H:4 * H])
        c = f * c + i * g
        h = o * jnp.tanh(c)
        outs.append(h @ params["w_fc"].T + params["b_fc"])
    x = jnp.stack(outs, axis=0)                      # (T, N, L) == (B, S, L)

    tr = params["trans"]
    sum_h = jnp.sum(x * labels, axis=-1).sum(-1, keepdims=True)
    lab1 = labels[:, :-1][:, :, :, None]
    lab2 = labels[:, 1:][:, :, None, :]
    mask = lab1 * lab2
    sum_g = jnp.sum(mask * tr[None, None], axis=(-1, -2)).sum(-1, keepdims=True)
    path_score = sum_g + sum_h                       # (B, 1)

    Z = x[:, 0, :]
    for t in range(1, x.shape[1]):
        Z = jax.scipy.special.logsumexp(Z[:, :, None] + tr[None], axis=-2)
        Z = Z + x[:, t, :]
    Z = jax.scipy.special.logsumexp(Z, axis=-1)      # (B,)
    return jnp.sum(-path_score + Z)                  # (B,1)+(B,) -> (B,B) -> sum


def init_params(key):
    ks = jax.random.split(key, 8)
    s = 1.0 / math.sqrt(LSTM_DIM)
    bound_fc = 1.0 / math.sqrt(LSTM_DIM)
    bound_tr = 1.0 / math.sqrt(NUM_LABEL)   # kaiming_uniform(a=sqrt(5)) bound
    return {
        "emb": jax.random.normal(ks[0], (NUM_EMBEDDINGS, EMBEDDING_DIM),
                                 jnp.float32),
        "w_ih": jax.random.uniform(ks[1], (4 * LSTM_DIM, EMBEDDING_DIM),
                                   jnp.float32, -s, s),
        "w_hh": jax.random.uniform(ks[2], (4 * LSTM_DIM, LSTM_DIM),
                                   jnp.float32, -s, s),
        "b_ih": jax.random.uniform(ks[3], (4 * LSTM_DIM,), jnp.float32, -s, s),
        "b_hh": jax.random.uniform(ks[4], (4 * LSTM_DIM,), jnp.float32, -s, s),
        "w_fc": jax.random.uniform(ks[5], (NUM_LABEL, LSTM_DIM), jnp.float32,
                                   -bound_fc, bound_fc),
        "b_fc": jax.random.uniform(ks[6], (NUM_LABEL,), jnp.float32,
                                   -bound_fc, bound_fc),
        "trans": jax.random.uniform(ks[7], (NUM_LABEL, NUM_LABEL), jnp.float32,
                                    -bound_tr, bound_tr),
    }


if __name__ == "__main__":
    key = jax.random.PRNGKey(0)
    k_param, k_ids, k_lab = jax.random.split(key, 3)
    params = init_params(k_param)

    D0, D1 = 4, 8   # ids shape: d0 = LSTM time / CRF batch, d1 = LSTM batch / CRF seq
    ids = jax.random.randint(k_ids, (D0, D1), 0, NUM_EMBEDDINGS, dtype=jnp.int32)
    label_ids = jax.random.randint(k_lab, (D0, D1), 0, NUM_LABEL, dtype=jnp.int32)
    labels = jax.nn.one_hot(label_ids, NUM_LABEL, dtype=jnp.float32)

    loss = test_ner_forward(ids, label_ids, params)
    loss = jax.block_until_ready(loss)

    ref = reference_forward(ids, labels, params)
    ref = jax.block_until_ready(ref)

    assert jnp.allclose(loss, ref, rtol=1e-3, atol=1e-3), (loss, ref)
    print("KERNEL_OK")
</pallas_src>

<mosaic_0001>
module attributes {stable_mosaic.version = 11 : i64} {
  func.func @kernel(%arg0: i32, %arg1: memref<32x1xi32, #tpu.memory_space<vmem>>, %arg2: memref<32x1xi32, #tpu.memory_space<vmem>>, %arg3: memref<50x64xf32, #tpu.memory_space<vmem>>, %arg4: memref<64x128xf32, #tpu.memory_space<vmem>>, %arg5: memref<32x128xf32, #tpu.memory_space<vmem>>, %arg6: memref<1x128xf32, #tpu.memory_space<vmem>>, %arg7: memref<32x5xf32, #tpu.memory_space<vmem>>, %arg8: memref<1x5xf32, #tpu.memory_space<vmem>>, %arg9: memref<5x5xf32, #tpu.memory_space<vmem>>, %arg10: memref<1x1xf32, #tpu.memory_space<vmem>>) attributes {dimension_semantics = [#tpu.dimension_semantics<arbitrary>], iteration_bounds = array<i64: 1>, scalar_prefetch = 0 : i64, scratch_operands = 0 : i64, tpu.core_type = #tpu.core_type<tc>, window_params = [{pipeline_mode = #tpu.pipeline_mode<synchronous>, transform_indices = @transform_0, window_bounds = array<i64: 32, 1>}, {pipeline_mode = #tpu.pipeline_mode<synchronous>, transform_indices = @transform_1, window_bounds = array<i64: 32, 1>}, {pipeline_mode = #tpu.pipeline_mode<synchronous>, transform_indices = @transform_2, window_bounds = array<i64: 50, 64>}, {pipeline_mode = #tpu.pipeline_mode<synchronous>, transform_indices = @transform_3, window_bounds = array<i64: 64, 128>}, {pipeline_mode = #tpu.pipeline_mode<synchronous>, transform_indices = @transform_4, window_bounds = array<i64: 32, 128>}, {pipeline_mode = #tpu.pipeline_mode<synchronous>, transform_indices = @transform_5, window_bounds = array<i64: 1, 128>}, {pipeline_mode = #tpu.pipeline_mode<synchronous>, transform_indices = @transform_6, window_bounds = array<i64: 32, 5>}, {pipeline_mode = #tpu.pipeline_mode<synchronous>, transform_indices = @transform_7, window_bounds = array<i64: 1, 5>}, {pipeline_mode = #tpu.pipeline_mode<synchronous>, transform_indices = @transform_8, window_bounds = array<i64: 5, 5>}, {pipeline_mode = #tpu.pipeline_mode<synchronous>, transform_indices = @transform_9, window_bounds = array<i64: 1, 1>}]} {
    %c0 = arith.constant 0 : index
    %c0_0 = arith.constant 0 : index
    %0 = vector.load %arg1[%c0, %c0_0] : memref<32x1xi32, #tpu.memory_space<vmem>>, vector<32x1xi32>
    %1 = tpu.iota {dimensions = array<i32: 1>} : vector<32x50xi32>
    %2 = vector.broadcast %0 : vector<32x1xi32> to vector<32x50xi32>
    %3 = arith.cmpi eq, %2, %1 : vector<32x50xi32>
    %4 = arith.extui %3 : vector<32x50xi1> to vector<32x50xi32>
    %5 = arith.sitofp %4 : vector<32x50xi32> to vector<32x50xf32>
    %c0_1 = arith.constant 0 : index
    %c0_2 = arith.constant 0 : index
    %6 = vector.load %arg3[%c0_1, %c0_2] : memref<50x64xf32, #tpu.memory_space<vmem>>, vector<50x64xf32>
    %cst = arith.constant dense<0.000000e+00> : vector<32x64xf32>
    %7 = tpu.matmul %5, %6, %cst {dimension_numbers = #tpu.dot_dimension_numbers<[1], [0], [0], [1], [0, 0, 1, 1], [], []>} : vector<32x50xf32>, vector<50x64xf32>, vector<32x64xf32> -> vector<32x64xf32>
    %c0_3 = arith.constant 0 : index
    %c0_4 = arith.constant 0 : index
    %8 = vector.load %arg4[%c0_3, %c0_4] : memref<64x128xf32, #tpu.memory_space<vmem>>, vector<64x128xf32>
    %cst_5 = arith.constant dense<0.000000e+00> : vector<32x128xf32>
    %9 = tpu.matmul %7, %8, %cst_5 {dimension_numbers = #tpu.dot_dimension_numbers<[1], [0], [0], [1], [0, 0, 1, 1], [], []>} : vector<32x64xf32>, vector<64x128xf32>, vector<32x128xf32> -> vector<32x128xf32>
    %c0_6 = arith.constant 0 : index
    %c0_7 = arith.constant 0 : index
    %10 = vector.load %arg6[%c0_6, %c0_7] : memref<1x128xf32, #tpu.memory_space<vmem>>, vector<1x128xf32>
    %11 = vector.broadcast %10 : vector<1x128xf32> to vector<32x128xf32>
    %12 = arith.addf %9, %11 : vector<32x128xf32>
    %c0_8 = arith.constant 0 : index
    %c0_9 = arith.constant 0 : index
    %13 = vector.load %arg5[%c0_8, %c0_9] : memref<32x128xf32, #tpu.memory_space<vmem>>, vector<32x128xf32>
    %cst_10 = arith.constant 0.000000e+00 : f32
    %14 = vector.broadcast %cst_10 : f32 to vector<8x32xf32>
    %cst_11 = arith.constant 0.000000e+00 : f32
    %15 = vector.broadcast %cst_11 : f32 to vector<8x32xf32>
    %16 = vector.extract_strided_slice %12 {offsets = [0, 0], sizes = [8, 128], strides = [1, 1]} : vector<32x128xf32> to vector<8x128xf32>
    %cst_12 = arith.constant dense<0.000000e+00> : vector<8x128xf32>
    %17 = tpu.matmul %14, %13, %cst_12 {dimension_numbers = #tpu.dot_dimension_numbers<[1], [0], [0], [1], [0, 0, 1, 1], [], []>} : vector<8x32xf32>, vector<32x128xf32>, vector<8x128xf32> -> vector<8x128xf32>
    %18 = arith.addf %16, %17 : vector<8x128xf32>
    %19 = arith.negf %18 : vector<8x128xf32>
    %20 = math.exp %19 : vector<8x128xf32>
    %cst_13 = arith.constant 1.000000e+00 : f32
    %21 = vector.broadcast %cst_13 : f32 to vector<8x128xf32>
    %22 = arith.addf %21, %20 : vector<8x128xf32>
    %23 = arith.divf %21, %22 : vector<8x128xf32>
    %24 = vector.extract_strided_slice %23 {offsets = [0, 0], sizes = [8, 32], strides = [1, 1]} : vector<8x128xf32> to vector<8x32xf32>
    %25 = vector.extract_strided_slice %23 {offsets = [0, 32], sizes = [8, 32], strides = [1, 1]} : vector<8x128xf32> to vector<8x32xf32>
    %26 = vector.extract_strided_slice %23 {offsets = [0, 96], sizes = [8, 32], strides = [1, 1]} : vector<8x128xf32> to vector<8x32xf32>
    %27 = vector.extract_strided_slice %18 {offsets = [0, 64], sizes = [8, 32], strides = [1, 1]} : vector<8x128xf32> to vector<8x32xf32>
    %28 = math.tanh %27 : vector<8x32xf32>
    %29 = arith.mulf %25, %15 : vector<8x32xf32>
    %30 = arith.mulf %24, %28 : vector<8x32xf32>
    %31 = arith.addf %29, %30 : vector<8x32xf32>
    %32 = math.tanh %31 : vector<8x32xf32>
    %33 = arith.mulf %26, %32 : vector<8x32xf32>
    %34 = vector.extract_strided_slice %12 {offsets = [8, 0], sizes = [8, 128], strides = [1, 1]} : vector<32x128xf32> to vector<8x128xf32>
    %cst_14 = arith.constant dense<0.000000e+00> : vector<8x128xf32>
    %35 = tpu.matmul %33, %13, %cst_14 {dimension_numbers = #tpu.dot_dimension_numbers<[1], [0], [0], [1], [0, 0, 1, 1], [], []>} : vector<8x32xf32>, vector<32x128xf32>, vector<8x128xf32> -> vector<8x128xf32>
    %36 = arith.addf %34, %35 : vector<8x128xf32>
    %37 = arith.negf %36 : vector<8x128xf32>
    %38 = math.exp %37 : vector<8x128xf32>
    %cst_15 = arith.constant 1.000000e+00 : f32
    %39 = vector.broadcast %cst_15 : f32 to vector<8x128xf32>
    %40 = arith.addf %39, %38 : vector<8x128xf32>
    %41 = arith.divf %39, %40 : vector<8x128xf32>
    %42 = vector.extract_strided_slice %41 {offsets = [0, 0], sizes = [8, 32], strides = [1, 1]} : vector<8x128xf32> to vector<8x32xf32>
    %43 = vector.extract_strided_slice %41 {offsets = [0, 32], sizes = [8, 32], strides = [1, 1]} : vector<8x128xf32> to vector<8x32xf32>
    %44 = vector.extract_strided_slice %41 {offsets = [0, 96], sizes = [8, 32], strides = [1, 1]} : vector<8x128xf32> to vector<8x32xf32>
    %45 = vector.extract_strided_slice %36 {offsets = [0, 64], sizes = [8, 32], strides = [1, 1]} : vector<8x128xf32> to vector<8x32xf32>
    %46 = math.tanh %45 : vector<8x32xf32>
    %47 = arith.mulf %43, %31 : vector<8x32xf32>
    %48 = arith.mulf %42, %46 : vector<8x32xf32>
    %49 = arith.addf %47, %48 : vector<8x32xf32>
    %50 = math.tanh %49 : vector<8x32xf32>
    %51 = arith.mulf %44, %50 : vector<8x32xf32>
    %52 = vector.extract_strided_slice %12 {offsets = [16, 0], sizes = [8, 128], strides = [1, 1]} : vector<32x128xf32> to vector<8x128xf32>
    %cst_16 = arith.constant dense<0.000000e+00> : vector<8x128xf32>
    %53 = tpu.matmul %51, %13, %cst_16 {dimension_numbers = #tpu.dot_dimension_numbers<[1], [0], [0], [1], [0, 0, 1, 1], [], []>} : vector<8x32xf32>, vector<32x128xf32>, vector<8x128xf32> -> vector<8x128xf32>
    %54 = arith.addf %52, %53 : vector<8x128xf32>
    %55 = arith.negf %54 : vector<8x128xf32>
    %56 = math.exp %55 : vector<8x128xf32>
    %cst_17 = arith.constant 1.000000e+00 : f32
    %57 = vector.broadcast %cst_17 : f32 to vector<8x128xf32>
    %58 = arith.addf %57, %56 : vector<8x128xf32>
    %59 = arith.divf %57, %58 : vector<8x128xf32>
    %60 = vector.extract_strided_slice %59 {offsets = [0, 0], sizes = [8, 32], strides = [1, 1]} : vector<8x128xf32> to vector<8x32xf32>
    %61 = vector.extract_strided_slice %59 {offsets = [0, 32], sizes = [8, 32], strides = [1, 1]} : vector<8x128xf32> to vector<8x32xf32>
    %62 = vector.extract_strided_slice %59 {offsets = [0, 96], sizes = [8, 32], strides = [1, 1]} : vector<8x128xf32> to vector<8x32xf32>
    %63 = vector.extract_strided_slice %54 {offsets = [0, 64], sizes = [8, 32], strides = [1, 1]} : vector<8x128xf32> to vector<8x32xf32>
    %64 = math.tanh %63 : vector<8x32xf32>
    %65 = arith.mulf %61, %49 : vector<8x32xf32>
    %66 = arith.mulf %60, %64 : vector<8x32xf32>
    %67 = arith.addf %65, %66 : vector<8x32xf32>
    %68 = math.tanh %67 : vector<8x32xf32>
    %69 = arith.mulf %62, %68 : vector<8x32xf32>
    %70 = vector.extract_strided_slice %12 {offsets = [24, 0], sizes = [8, 128], strides = [1, 1]} : vector<32x128xf32> to vector<8x128xf32>
    %cst_18 = arith.constant dense<0.000000e+00> : vector<8x128xf32>
    %71 = tpu.matmul %69, %13, %cst_18 {dimension_numbers = #tpu.dot_dimension_numbers<[1], [0], [0], [1], [0, 0, 1, 1], [], []>} : vector<8x32xf32>, vector<32x128xf32>, vector<8x128xf32> -> vector<8x128xf32>
    %72 = arith.addf %70, %71 : vector<8x128xf32>
    %73 = arith.negf %72 : vector<8x128xf32>
    %74 = math.exp %73 : vector<8x128xf32>
    %cst_19 = arith.constant 1.000000e+00 : f32
    %75 = vector.broadcast %cst_19 : f32 to vector<8x128xf32>
    %76 = arith.addf %75, %74 : vector<8x128xf32>
    %77 = arith.divf %75, %76 : vector<8x128xf32>
    %78 = vector.extract_strided_slice %77 {offsets = [0, 0], sizes = [8, 32], strides = [1, 1]} : vector<8x128xf32> to vector<8x32xf32>
    %79 = vector.extract_strided_slice %77 {offsets = [0, 32], sizes = [8, 32], strides = [1, 1]} : vector<8x128xf32> to vector<8x32xf32>
    %80 = vector.extract_strided_slice %77 {offsets = [0, 96], sizes = [8, 32], strides = [1, 1]} : vector<8x128xf32> to vector<8x32xf32>
    %81 = vector.extract_strided_slice %72 {offsets = [0, 64], sizes = [8, 32], strides = [1, 1]} : vector<8x128xf32> to vector<8x32xf32>
    %82 = math.tanh %81 : vector<8x32xf32>
    %83 = arith.mulf %79, %67 : vector<8x32xf32>
    %84 = arith.mulf %78, %82 : vector<8x32xf32>
    %85 = arith.addf %83, %84 : vector<8x32xf32>
    %86 = math.tanh %85 : vector<8x32xf32>
    %87 = arith.mulf %80, %86 : vector<8x32xf32>
    %88 = tpu.concatenate %33, %51, %69, %87 in 0 : vector<8x32xf32>, vector<8x32xf32>, vector<8x32xf32>, vector<8x32xf32> -> vector<32x32xf32>
    %c0_20 = arith.constant 0 : index
    %c0_21 = arith.constant 0 : index
    %89 = vector.load %arg7[%c0_20, %c0_21] : memref<32x5xf32, #tpu.memory_space<vmem>>, vector<32x5xf32>
    %cst_22 = arith.constant dense<0.000000e+00> : vector<32x5xf32>
    %90 = tpu.matmul %88, %89, %cst_22 {dimension_numbers = #tpu.dot_dimension_numbers<[1], [0], [0], [1], [0, 0, 1, 1], [], []>} : vector<32x32xf32>, vector<32x5xf32>, vector<32x5xf32> -> vector<32x5xf32>
    %c0_23 = arith.constant 0 : index
    %c0_24 = arith.constant 0 : index
    %91 = vector.load %arg8[%c0_23, %c0_24] : memref<1x5xf32, #tpu.memory_space<vmem>>, vector<1x5xf32>
    %92 = vector.broadcast %91 : vector<1x5xf32> to vector<32x5xf32>
    %93 = arith.addf %90, %92 : vector<32x5xf32>
    %c0_25 = arith.constant 0 : index
    %c0_26 = arith.constant 0 : index
    %94 = vector.load %arg9[%c0_25, %c0_26] : memref<5x5xf32, #tpu.memory_space<vmem>>, vector<5x5xf32>
    %c0_27 = arith.constant 0 : index
    %c0_28 = arith.constant 0 : index
    %95 = vector.load %arg2[%c0_27, %c0_28] : memref<32x1xi32, #tpu.memory_space<vmem>>, vector<32x1xi32>
    %96 = tpu.iota {dimensions = array<i32: 1>} : vector<32x5xi32>
    %97 = vector.broadcast %95 : vector<32x1xi32> to vector<32x5xi32>
    %98 = arith.cmpi eq, %97, %96 : vector<32x5xi32>
    %99 = arith.extui %98 : vector<32x5xi1> to vector<32x5xi32>
    %100 = arith.sitofp %99 : vector<32x5xi32> to vector<32x5xf32>
    %101 = arith.mulf %93, %100 : vector<32x5xf32>
    %102 = vector.shape_cast %101 : vector<32x5xf32> to vector<1x32x5xf32>
    %cst_29 = arith.constant dense<0.000000e+00> : vector<1xf32>
    %103 = vector.multi_reduction <add>, %102, %cst_29 [1, 2] : vector<1x32x5xf32> to vector<1xf32>
    %104 = vector.shape_cast %103 : vector<1xf32> to vector<1x1x1xf32>
    %105 = vector.extract %104[0, 0, 0] : f32 from vector<1x1x1xf32>
    %106 = vector.broadcast %105 : f32 to vector<1x1xf32>
    %cst_30 = arith.constant dense<0.000000e+00> : vector<32x5xf32>
    %107 = tpu.matmul %100, %94, %cst_30 {dimension_numbers = #tpu.dot_dimension_numbers<[1], [0], [0], [1], [0, 0, 1, 1], [], []>} : vector<32x5xf32>, vector<5x5xf32>, vector<32x5xf32> -> vector<32x5xf32>
    %108 = vector.shape_cast %107 : vector<32x5xf32> to vector<4x8x5xf32>
    %109 = vector.shape_cast %100 : vector<32x5xf32> to vector<4x8x5xf32>
    %cst_31 = arith.constant 0.000000e+00 : f32
    %110 = vector.broadcast %cst_31 : f32 to vector<4x5xf32>
    %111 = vector.extract_strided_slice %108 {offsets = [0, 0, 0], sizes = [4, 1, 5], strides = [1, 1, 1]} : vector<4x8x5xf32> to vector<4x1x5xf32>
    %112 = vector.shape_cast %111 : vector<4x1x5xf32> to vector<4x5xf32>
    %113 = vector.extract_strided_slice %109 {offsets = [0, 1, 0], sizes = [4, 1, 5], strides = [1, 1, 1]} : vector<4x8x5xf32> to vector<4x1x5xf32>
    %114 = vector.shape_cast %113 : vector<4x1x5xf32> to vector<4x5xf32>
    %115 = arith.mulf %112, %114 : vector<4x5xf32>
    %116 = arith.addf %110, %115 : vector<4x5xf32>
    %117 = vector.extract_strided_slice %108 {offsets = [0, 1, 0], sizes = [4, 1, 5], strides = [1, 1, 1]} : vector<4x8x5xf32> to vector<4x1x5xf32>
    %118 = vector.shape_cast %117 : vector<4x1x5xf32> to vector<4x5xf32>
    %119 = vector.extract_strided_slice %109 {offsets = [0, 2, 0], sizes = [4, 1, 5], strides = [1, 1, 1]} : vector<4x8x5xf32> to vector<4x1x5xf32>
    %120 = vector.shape_cast %119 : vector<4x1x5xf32> to vector<4x5xf32>
    %121 = arith.mulf %118, %120 : vector<4x5xf32>
    %122 = arith.addf %116, %121 : vector<4x5xf32>
    %123 = vector.extract_strided_slice %108 {offsets = [0, 2, 0], sizes = [4, 1, 5], strides = [1, 1, 1]} : vector<4x8x5xf32> to vector<4x1x5xf32>
    %124 = vector.shape_cast %123 : vector<4x1x5xf32> to vector<4x5xf32>
    %125 = vector.extract_strided_slice %109 {offsets = [0, 3, 0], sizes = [4, 1, 5], strides = [1, 1, 1]} : vector<4x8x5xf32> to vector<4x1x5xf32>
    %126 = vector.shape_cast %125 : vector<4x1x5xf32> to vector<4x5xf32>
    %127 = arith.mulf %124, %126 : vector<4x5xf32>
    %128 = arith.addf %122, %127 : vector<4x5xf32>
    %129 = vector.extract_strided_slice %108 {offsets = [0, 3, 0], sizes = [4, 1, 5], strides = [1, 1, 1]} : vector<4x8x5xf32> to vector<4x1x5xf32>
    %130 = vector.shape_cast %129 : vector<4x1x5xf32> to vector<4x5xf32>
    %131 = vector.extract_strided_slice %109 {offsets = [0, 4, 0], sizes = [4, 1, 5], strides = [1, 1, 1]} : vector<4x8x5xf32> to vector<4x1x5xf32>
    %132 = vector.shape_cast %131 : vector<4x1x5xf32> to vector<4x5xf32>
    %133 = arith.mulf %130, %132 : vector<4x5xf32>
    %134 = arith.addf %128, %133 : vector<4x5xf32>
    %135 = vector.extract_strided_slice %108 {offsets = [0, 4, 0], sizes = [4, 1, 5], strides = [1, 1, 1]} : vector<4x8x5xf32> to vector<4x1x5xf32>
    %136 = vector.shape_cast %135 : vector<4x1x5xf32> to vector<4x5xf32>
    %137 = vector.extract_strided_slice %109 {offsets = [0, 5, 0], sizes = [4, 1, 5], strides = [1, 1, 1]} : vector<4x8x5xf32> to vector<4x1x5xf32>
    %138 = vector.shape_cast %137 : vector<4x1x5xf32> to vector<4x5xf32>
    %139 = arith.mulf %136, %138 : vector<4x5xf32>
    %140 = arith.addf %134, %139 : vector<4x5xf32>
    %141 = vector.extract_strided_slice %108 {offsets = [0, 5, 0], sizes = [4, 1, 5], strides = [1, 1, 1]} : vector<4x8x5xf32> to vector<4x1x5xf32>
    %142 = vector.shape_cast %141 : vector<4x1x5xf32> to vector<4x5xf32>
    %143 = vector.extract_strided_slice %109 {offsets = [0, 6, 0], sizes = [4, 1, 5], strides = [1, 1, 1]} : vector<4x8x5xf32> to vector<4x1x5xf32>
    %144 = vector.shape_cast %143 : vector<4x1x5xf32> to vector<4x5xf32>
    %145 = arith.mulf %142, %144 : vector<4x5xf32>
    %146 = arith.addf %140, %145 : vector<4x5xf32>
    %147 = vector.extract_strided_slice %108 {offsets = [0, 6, 0], sizes = [4, 1, 5], strides = [1, 1, 1]} : vector<4x8x5xf32> to vector<4x1x5xf32>
    %148 = vector.shape_cast %147 : vector<4x1x5xf32> to vector<4x5xf32>
    %149 = vector.extract_strided_slice %109 {offsets = [0, 7, 0], sizes = [4, 1, 5], strides = [1, 1, 1]} : vector<4x8x5xf32> to vector<4x1x5xf32>
    %150 = vector.shape_cast %149 : vector<4x1x5xf32> to vector<4x5xf32>
    %151 = arith.mulf %148, %150 : vector<4x5xf32>
    %152 = arith.addf %146, %151 : vector<4x5xf32>
    %153 = vector.shape_cast %152 : vector<4x5xf32> to vector<1x4x5xf32>
    %cst_32 = arith.constant dense<0.000000e+00> : vector<1xf32>
    %154 = vector.multi_reduction <add>, %153, %cst_32 [1, 2] : vector<1x4x5xf32> to vector<1xf32>
    %155 = vector.shape_cast %154 : vector<1xf32> to vector<1x1x1xf32>
    %156 = vector.extract %155[0, 0, 0] : f32 from vector<1x1x1xf32>
    %157 = vector.broadcast %156 : f32 to vector<1x1xf32>
    %158 = arith.addf %106, %157 : vector<1x1xf32>
    %159 = vector.shape_cast %93 : vector<32x5xf32> to vector<4x8x5xf32>
    %cst_33 = arith.constant dense<0xFF800000> : vector<5xf32>
    %160 = vector.multi_reduction <maximumf>, %94, %cst_33 [0] : vector<5x5xf32> to vector<5xf32>
    %161 = vector.shape_cast %160 : vector<5xf32> to vector<1x5xf32>
    %162 = vector.broadcast %161 : vector<1x5xf32> to vector<5x5xf32>
    %163 = arith.subf %94, %162 : vector<5x5xf32>
    %164 = math.exp %163 : vector<5x5xf32>
    %165 = vector.extract_strided_slice %164 {offsets = [0, 0], sizes = [1, 5], strides = [1, 1]} : vector<5x5xf32> to vector<1x5xf32>
    %166 = vector.extract_strided_slice %164 {offsets = [1, 0], sizes = [1, 5], strides = [1, 1]} : vector<5x5xf32> to vector<1x5xf32>
    %167 = vector.extract_strided_slice %164 {offsets = [2, 0], sizes = [1, 5], strides = [1, 1]} : vector<5x5xf32> to vector<1x5xf32>
    %168 = vector.extract_strided_slice %164 {offsets = [3, 0], sizes = [1, 5], strides = [1, 1]} : vector<5x5xf32> to vector<1x5xf32>
    %169 = vector.extract_strided_slice %164 {offsets = [4, 0], sizes = [1, 5], strides = [1, 1]} : vector<5x5xf32> to vector<1x5xf32>
    %170 = vector.extract_strided_slice %159 {offsets = [0, 0, 0], sizes = [4, 1, 5], strides = [1, 1, 1]} : vector<4x8x5xf32> to vector<4x1x5xf32>
    %171 = vector.shape_cast %170 : vector<4x1x5xf32> to vector<4x5xf32>
    %cst_34 = arith.constant dense<0xFF800000> : vector<4xf32>
    %172 = vector.multi_reduction <maximumf>, %171, %cst_34 [1] : vector<4x5xf32> to vector<4xf32>
    %173 = vector.shape_cast %172 : vector<4xf32> to vector<4x1xf32>
    %174 = vector.broadcast %173 : vector<4x1xf32> to vector<4x5xf32>
    %175 = arith.subf %171, %174 : vector<4x5xf32>
    %176 = math.exp %175 : vector<4x5xf32>
    %177 = vector.extract_strided_slice %176 {offsets = [0, 0], sizes = [4, 1], strides = [1, 1]} : vector<4x5xf32> to vector<4x1xf32>
    %178 = vector.broadcast %177 : vector<4x1xf32> to vector<4x5xf32>
    %179 = vector.broadcast %165 : vector<1x5xf32> to vector<4x5xf32>
    %180 = arith.mulf %178, %179 : vector<4x5xf32>
    %181 = vector.extract_strided_slice %176 {offsets = [0, 1], sizes = [4, 1], strides = [1, 1]} : vector<4x5xf32> to vector<4x1xf32>
    %182 = vector.broadcast %181 : vector<4x1xf32> to vector<4x5xf32>
    %183 = vector.broadcast %166 : vector<1x5xf32> to vector<4x5xf32>
    %184 = arith.mulf %182, %183 : vector<4x5xf32>
    %185 = arith.addf %180, %184 : vector<4x5xf32>
    %186 = vector.extract_strided_slice %176 {offsets = [0, 2], sizes = [4, 1], strides = [1, 1]} : vector<4x5xf32> to vector<4x1xf32>
    %187 = vector.broadcast %186 : vector<4x1xf32> to vector<4x5xf32>
    %188 = vector.broadcast %167 : vector<1x5xf32> to vector<4x5xf32>
    %189 = arith.mulf %187, %188 : vector<4x5xf32>
    %190 = arith.addf %185, %189 : vector<4x5xf32>
    %191 = vector.extract_strided_slice %176 {offsets = [0, 3], sizes = [4, 1], strides = [1, 1]} : vector<4x5xf32> to vector<4x1xf32>
    %192 = vector.broadcast %191 : vector<4x1xf32> to vector<4x5xf32>
    %193 = vector.broadcast %168 : vector<1x5xf32> to vector<4x5xf32>
    %194 = arith.mulf %192, %193 : vector<4x5xf32>
    %195 = arith.addf %190, %194 : vector<4x5xf32>
    %196 = vector.extract_strided_slice %176 {offsets = [0, 4], sizes = [4, 1], strides = [1, 1]} : vector<4x5xf32> to vector<4x1xf32>
    %197 = vector.broadcast %196 : vector<4x1xf32> to vector<4x5xf32>
    %198 = vector.broadcast %169 : vector<1x5xf32> to vector<4x5xf32>
    %199 = arith.mulf %197, %198 : vector<4x5xf32>
    %200 = arith.addf %195, %199 : vector<4x5xf32>
    %201 = math.log %200 : vector<4x5xf32>
    %202 = vector.broadcast %173 : vector<4x1xf32> to vector<4x5xf32>
    %203 = arith.addf %201, %202 : vector<4x5xf32>
    %204 = vector.broadcast %161 : vector<1x5xf32> to vector<4x5xf32>
    %205 = arith.addf %203, %204 : vector<4x5xf32>
    %206 = vector.extract_strided_slice %159 {offsets = [0, 1, 0], sizes = [4, 1, 5], strides = [1, 1, 1]} : vector<4x8x5xf32> to vector<4x1x5xf32>
    %207 = vector.shape_cast %206 : vector<4x1x5xf32> to vector<4x5xf32>
    %208 = arith.addf %205, %207 : vector<4x5xf32>
    %cst_35 = arith.constant dense<0xFF800000> : vector<4xf32>
    %209 = vector.multi_reduction <maximumf>, %208, %cst_35 [1] : vector<4x5xf32> to vector<4xf32>
    %210 = vector.shape_cast %209 : vector<4xf32> to vector<4x1xf32>
    %211 = vector.broadcast %210 : vector<4x1xf32> to vector<4x5xf32>
    %212 = arith.subf %208, %211 : vector<4x5xf32>
    %213 = math.exp %212 : vector<4x5xf32>
    %214 = vector.extract_strided_slice %213 {offsets = [0, 0], sizes = [4, 1], strides = [1, 1]} : vector<4x5xf32> to vector<4x1xf32>
    %215 = vector.broadcast %214 : vector<4x1xf32> to vector<4x5xf32>
    %216 = vector.broadcast %165 : vector<1x5xf32> to vector<4x5xf32>
    %217 = arith.mulf %215, %216 : vector<4x5xf32>
    %218 = vector.extract_strided_slice %213 {offsets = [0, 1], sizes = [4, 1], strides = [1, 1]} : vector<4x5xf32> to vector<4x1xf32>
    %219 = vector.broadcast %218 : vector<4x1xf32> to vector<4x5xf32>
    %220 = vector.broadcast %166 : vector<1x5xf32> to vector<4x5xf32>
    %221 = arith.mulf %219, %220 : vector<4x5xf32>
    %222 = arith.addf %217, %221 : vector<4x5xf32>
    %223 = vector.extract_strided_slice %213 {offsets = [0, 2], sizes = [4, 1], strides = [1, 1]} : vector<4x5xf32> to vector<4x1xf32>
    %224 = vector.broadcast %223 : vector<4x1xf32> to vector<4x5xf32>
    %225 = vector.broadcast %167 : vector<1x5xf32> to vector<4x5xf32>
    %226 = arith.mulf %224, %225 : vector<4x5xf32>
    %227 = arith.addf %222, %226 : vector<4x5xf32>
    %228 = vector.extract_strided_slice %213 {offsets = [0, 3], sizes = [4, 1], strides = [1, 1]} : vector<4x5xf32> to vector<4x1xf32>
    %229 = vector.broadcast %228 : vector<4x1xf32> to vector<4x5xf32>
    %230 = vector.broadcast %168 : vector<1x5xf32> to vector<4x5xf32>
    %231 = arith.mulf %229, %230 : vector<4x5xf32>
    %232 = arith.addf %227, %231 : vector<4x5xf32>
    %233 = vector.extract_strided_slice %213 {offsets = [0, 4], sizes = [4, 1], strides = [1, 1]} : vector<4x5xf32> to vector<4x1xf32>
    %234 = vector.broadcast %233 : vector<4x1xf32> to vector<4x5xf32>
    %235 = vector.broadcast %169 : vector<1x5xf32> to vector<4x5xf32>
    %236 = arith.mulf %234, %235 : vector<4x5xf32>
    %237 = arith.addf %232, %236 : vector<4x5xf32>
    %238 = math.log %237 : vector<4x5xf32>
    %239 = vector.broadcast %210 : vector<4x1xf32> to vector<4x5xf32>
    %240 = arith.addf %238, %239 : vector<4x5xf32>
    %241 = vector.broadcast %161 : vector<1x5xf32> to vector<4x5xf32>
    %242 = arith.addf %240, %241 : vector<4x5xf32>
    %243 = vector.extract_strided_slice %159 {offsets = [0, 2, 0], sizes = [4, 1, 5], strides = [1, 1, 1]} : vector<4x8x5xf32> to vector<4x1x5xf32>
    %244 = vector.shape_cast %243 : vector<4x1x5xf32> to vector<4x5xf32>
    %245 = arith.addf %242, %244 : vector<4x5xf32>
    %cst_36 = arith.constant dense<0xFF800000> : vector<4xf32>
    %246 = vector.multi_reduction <maximumf>, %245, %cst_36 [1] : vector<4x5xf32> to vector<4xf32>
    %247 = vector.shape_cast %246 : vector<4xf32> to vector<4x1xf32>
    %248 = vector.broadcast %247 : vector<4x1xf32> to vector<4x5xf32>
    %249 = arith.subf %245, %248 : vector<4x5xf32>
    %250 = math.exp %249 : vector<4x5xf32>
    %251 = vector.extract_strided_slice %250 {offsets = [0, 0], sizes = [4, 1], strides = [1, 1]} : vector<4x5xf32> to vector<4x1xf32>
    %252 = vector.broadcast %251 : vector<4x1xf32> to vector<4x5xf32>
    %253 = vector.broadcast %165 : vector<1x5xf32> to vector<4x5xf32>
    %254 = arith.mulf %252, %253 : vector<4x5xf32>
    %255 = vector.extract_strided_slice %250 {offsets = [0, 1], sizes = [4, 1], strides = [1, 1]} : vector<4x5xf32> to vector<4x1xf32>
    %256 = vector.broadcast %255 : vector<4x1xf32> to vector<4x5xf32>
    %257 = vector.broadcast %166 : vector<1x5xf32> to vector<4x5xf32>
    %258 = arith.mulf %256, %257 : vector<4x5xf32>
    %259 = arith.addf %254, %258 : vector<4x5xf32>
    %260 = vector.extract_strided_slice %250 {offsets = [0, 2], sizes = [4, 1], strides = [1, 1]} : vector<4x5xf32> to vector<4x1xf32>
    %261 = vector.broadcast %260 : vector<4x1xf32> to vector<4x5xf32>
    %262 = vector.broadcast %167 : vector<1x5xf32> to vector<4x5xf32>
    %263 = arith.mulf %261, %262 : vector<4x5xf32>
    %264 = arith.addf %259, %263 : vector<4x5xf32>
    %265 = vector.extract_strided_slice %250 {offsets = [0, 3], sizes = [4, 1], strides = [1, 1]} : vector<4x5xf32> to vector<4x1xf32>
    %266 = vector.broadcast %265 : vector<4x1xf32> to vector<4x5xf32>
    %267 = vector.broadcast %168 : vector<1x5xf32> to vector<4x5xf32>
    %268 = arith.mulf %266, %267 : vector<4x5xf32>
    %269 = arith.addf %264, %268 : vector<4x5xf32>
    %270 = vector.extract_strided_slice %250 {offsets = [0, 4], sizes = [4, 1], strides = [1, 1]} : vector<4x5xf32> to vector<4x1xf32>
    %271 = vector.broadcast %270 : vector<4x1xf32> to vector<4x5xf32>
    %272 = vector.broadcast %169 : vector<1x5xf32> to vector<4x5xf32>
    %273 = arith.mulf %271, %272 : vector<4x5xf32>
    %274 = arith.addf %269, %273 : vector<4x5xf32>
    %275 = math.log %274 : vector<4x5xf32>
    %276 = vector.broadcast %247 : vector<4x1xf32> to vector<4x5xf32>
    %277 = arith.addf %275, %276 : vector<4x5xf32>
    %278 = vector.broadcast %161 : vector<1x5xf32> to vector<4x5xf32>
    %279 = arith.addf %277, %278 : vector<4x5xf32>
    %280 = vector.extract_strided_slice %159 {offsets = [0, 3, 0], sizes = [4, 1, 5], strides = [1, 1, 1]} : vector<4x8x5xf32> to vector<4x1x5xf32>
    %281 = vector.shape_cast %280 : vector<4x1x5xf32> to vector<4x5xf32>
    %282 = arith.addf %279, %281 : vector<4x5xf32>
    %cst_37 = arith.constant dense<0xFF800000> : vector<4xf32>
    %283 = vector.multi_reduction <maximumf>, %282, %cst_37 [1] : vector<4x5xf32> to vector<4xf32>
    %284 = vector.shape_cast %283 : vector<4xf32> to vector<4x1xf32>
    %285 = vector.broadcast %284 : vector<4x1xf32> to vector<4x5xf32>
    %286 = arith.subf %282, %285 : vector<4x5xf32>
    %287 = math.exp %286 : vector<4x5xf32>
    %288 = vector.extract_strided_slice %287 {offsets = [0, 0], sizes = [4, 1], strides = [1, 1]} : vector<4x5xf32> to vector<4x1xf32>
    %289 = vector.broadcast %288 : vector<4x1xf32> to vector<4x5xf32>
    %290 = vector.broadcast %165 : vector<1x5xf32> to vector<4x5xf32>
    %291 = arith.mulf %289, %290 : vector<4x5xf32>
    %292 = vector.extract_strided_slice %287 {offsets = [0, 1], sizes = [4, 1], strides = [1, 1]} : vector<4x5xf32> to vector<4x1xf32>
    %293 = vector.broadcast %292 : vector<4x1xf32> to vector<4x5xf32>
    %294 = vector.broadcast %166 : vector<1x5xf32> to vector<4x5xf32>
    %295 = arith.mulf %293, %294 : vector<4x5xf32>
    %296 = arith.addf %291, %295 : vector<4x5xf32>
    %297 = vector.extract_strided_slice %287 {offsets = [0, 2], sizes = [4, 1], strides = [1, 1]} : vector<4x5xf32> to vector<4x1xf32>
    %298 = vector.broadcast %297 : vector<4x1xf32> to vector<4x5xf32>
    %299 = vector.broadcast %167 : vector<1x5xf32> to vector<4x5xf32>
    %300 = arith.mulf %298, %299 : vector<4x5xf32>
    %301 = arith.addf %296, %300 : vector<4x5xf32>
    %302 = vector.extract_strided_slice %287 {offsets = [0, 3], sizes = [4, 1], strides = [1, 1]} : vector<4x5xf32> to vector<4x1xf32>
    %303 = vector.broadcast %302 : vector<4x1xf32> to vector<4x5xf32>
    %304 = vector.broadcast %168 : vector<1x5xf32> to vector<4x5xf32>
    %305 = arith.mulf %303, %304 : vector<4x5xf32>
    %306 = arith.addf %301, %305 : vector<4x5xf32>
    %307 = vector.extract_strided_slice %287 {offsets = [0, 4], sizes = [4, 1], strides = [1, 1]} : vector<4x5xf32> to vector<4x1xf32>
    %308 = vector.broadcast %307 : vector<4x1xf32> to vector<4x5xf32>
    %309 = vector.broadcast %169 : vector<1x5xf32> to vector<4x5xf32>
    %310 = arith.mulf %308, %309 : vector<4x5xf32>
    %311 = arith.addf %306, %310 : vector<4x5xf32>
    %312 = math.log %311 : vector<4x5xf32>
    %313 = vector.broadcast %284 : vector<4x1xf32> to vector<4x5xf32>
    %314 = arith.addf %312, %313 : vector<4x5xf32>
    %315 = vector.broadcast %161 : vector<1x5xf32> to vector<4x5xf32>
    %316 = arith.addf %314, %315 : vector<4x5xf32>
    %317 = vector.extract_strided_slice %159 {offsets = [0, 4, 0], sizes = [4, 1, 5], strides = [1, 1, 1]} : vector<4x8x5xf32> to vector<4x1x5xf32>
    %318 = vector.shape_cast %317 : vector<4x1x5xf32> to vector<4x5xf32>
    %319 = arith.addf %316, %318 : vector<4x5xf32>
    %cst_38 = arith.constant dense<0xFF800000> : vector<4xf32>
    %320 = vector.multi_reduction <maximumf>, %319, %cst_38 [1] : vector<4x5xf32> to vector<4xf32>
    %321 = vector.shape_cast %320 : vector<4xf32> to vector<4x1xf32>
    %322 = vector.broadcast %321 : vector<4x1xf32> to vector<4x5xf32>
    %323 = arith.subf %319, %322 : vector<4x5xf32>
    %324 = math.exp %323 : vector<4x5xf32>
    %325 = vector.extract_strided_slice %324 {offsets = [0, 0], sizes = [4, 1], strides = [1, 1]} : vector<4x5xf32> to vector<4x1xf32>
    %326 = vector.broadcast %325 : vector<4x1xf32> to vector<4x5xf32>
    %327 = vector.broadcast %165 : vector<1x5xf32> to vector<4x5xf32>
    %328 = arith.mulf %326, %327 : vector<4x5xf32>
    %329 = vector.extract_strided_slice %324 {offsets = [0, 1], sizes = [4, 1], strides = [1, 1]} : vector<4x5xf32> to vector<4x1xf32>
    %330 = vector.broadcast %329 : vector<4x1xf32> to vector<4x5xf32>
    %331 = vector.broadcast %166 : vector<1x5xf32> to vector<4x5xf32>
    %332 = arith.mulf %330, %331 : vector<4x5xf32>
    %333 = arith.addf %328, %332 : vector<4x5xf32>
    %334 = vector.extract_strided_slice %324 {offsets = [0, 2], sizes = [4, 1], strides = [1, 1]} : vector<4x5xf32> to vector<4x1xf32>
    %335 = vector.broadcast %334 : vector<4x1xf32> to vector<4x5xf32>
    %336 = vector.broadcast %167 : vector<1x5xf32> to vector<4x5xf32>
    %337 = arith.mulf %335, %336 : vector<4x5xf32>
    %338 = arith.addf %333, %337 : vector<4x5xf32>
    %339 = vector.extract_strided_slice %324 {offsets = [0, 3], sizes = [4, 1], strides = [1, 1]} : vector<4x5xf32> to vector<4x1xf32>
    %340 = vector.broadcast %339 : vector<4x1xf32> to vector<4x5xf32>
    %341 = vector.broadcast %168 : vector<1x5xf32> to vector<4x5xf32>
    %342 = arith.mulf %340, %341 : vector<4x5xf32>
    %343 = arith.addf %338, %342 : vector<4x5xf32>
    %344 = vector.extract_strided_slice %324 {offsets = [0, 4], sizes = [4, 1], strides = [1, 1]} : vector<4x5xf32> to vector<4x1xf32>
    %345 = vector.broadcast %344 : vector<4x1xf32> to vector<4x5xf32>
    %346 = vector.broadcast %169 : vector<1x5xf32> to vector<4x5xf32>
    %347 = arith.mulf %345, %346 : vector<4x5xf32>
    %348 = arith.addf %343, %347 : vector<4x5xf32>
    %349 = math.log %348 : vector<4x5xf32>
    %350 = vector.broadcast %321 : vector<4x1xf32> to vector<4x5xf32>
    %351 = arith.addf %349, %350 : vector<4x5xf32>
    %352 = vector.broadcast %161 : vector<1x5xf32> to vector<4x5xf32>
    %353 = arith.addf %351, %352 : vector<4x5xf32>
    %354 = vector.extract_strided_slice %159 {offsets = [0, 5, 0], sizes = [4, 1, 5], strides = [1, 1, 1]} : vector<4x8x5xf32> to vector<4x1x5xf32>
    %355 = vector.shape_cast %354 : vector<4x1x5xf32> to vector<4x5xf32>
    %356 = arith.addf %353, %355 : vector<4x5xf32>
    %cst_39 = arith.constant dense<0xFF800000> : vector<4xf32>
    %357 = vector.multi_reduction <maximumf>, %356, %cst_39 [1] : vector<4x5xf32> to vector<4xf32>
    %358 = vector.shape_cast %357 : vector<4xf32> to vector<4x1xf32>
    %359 = vector.broadcast %358 : vector<4x1xf32> to vector<4x5xf32>
    %360 = arith.subf %356, %359 : vector<4x5xf32>
    %361 = math.exp %360 : vector<4x5xf32>
    %362 = vector.extract_strided_slice %361 {offsets = [0, 0], sizes = [4, 1], strides = [1, 1]} : vector<4x5xf32> to vector<4x1xf32>
    %363 = vector.broadcast %362 : vector<4x1xf32> to vector<4x5xf32>
    %364 = vector.broadcast %165 : vector<1x5xf32> to vector<4x5xf32>
    %365 = arith.mulf %363, %364 : vector<4x5xf32>
    %366 = vector.extract_strided_slice %361 {offsets = [0, 1], sizes = [4, 1], strides = [1, 1]} : vector<4x5xf32> to vector<4x1xf32>
    %367 = vector.broadcast %366 : vector<4x1xf32> to vector<4x5xf32>
    %368 = vector.broadcast %166 : vector<1x5xf32> to vector<4x5xf32>
    %369 = arith.mulf %367, %368 : vector<4x5xf32>
    %370 = arith.addf %365, %369 : vector<4x5xf32>
    %371 = vector.extract_strided_slice %361 {offsets = [0, 2], sizes = [4, 1], strides = [1, 1]} : vector<4x5xf32> to vector<4x1xf32>
    %372 = vector.broadcast %371 : vector<4x1xf32> to vector<4x5xf32>
    %373 = vector.broadcast %167 : vector<1x5xf32> to vector<4x5xf32>
    %374 = arith.mulf %372, %373 : vector<4x5xf32>
    %375 = arith.addf %370, %374 : vector<4x5xf32>
    %376 = vector.extract_strided_slice %361 {offsets = [0, 3], sizes = [4, 1], strides = [1, 1]} : vector<4x5xf32> to vector<4x1xf32>
    %377 = vector.broadcast %376 : vector<4x1xf32> to vector<4x5xf32>
    %378 = vector.broadcast %168 : vector<1x5xf32> to vector<4x5xf32>
    %379 = arith.mulf %377, %378 : vector<4x5xf32>
    %380 = arith.addf %375, %379 : vector<4x5xf32>
    %381 = vector.extract_strided_slice %361 {offsets = [0, 4], sizes = [4, 1], strides = [1, 1]} : vector<4x5xf32> to vector<4x1xf32>
    %382 = vector.broadcast %381 : vector<4x1xf32> to vector<4x5xf32>
    %383 = vector.broadcast %169 : vector<1x5xf32> to vector<4x5xf32>
    %384 = arith.mulf %382, %383 : vector<4x5xf32>
    %385 = arith.addf %380, %384 : vector<4x5xf32>
    %386 = math.log %385 : vector<4x5xf32>
    %387 = vector.broadcast %358 : vector<4x1xf32> to vector<4x5xf32>
    %388 = arith.addf %386, %387 : vector<4x5xf32>
    %389 = vector.broadcast %161 : vector<1x5xf32> to vector<4x5xf32>
    %390 = arith.addf %388, %389 : vector<4x5xf32>
    %391 = vector.extract_strided_slice %159 {offsets = [0, 6, 0], sizes = [4, 1, 5], strides = [1, 1, 1]} : vector<4x8x5xf32> to vector<4x1x5xf32>
    %392 = vector.shape_cast %391 : vector<4x1x5xf32> to vector<4x5xf32>
    %393 = arith.addf %390, %392 : vector<4x5xf32>
    %cst_40 = arith.constant dense<0xFF800000> : vector<4xf32>
    %394 = vector.multi_reduction <maximumf>, %393, %cst_40 [1] : vector<4x5xf32> to vector<4xf32>
    %395 = vector.shape_cast %394 : vector<4xf32> to vector<4x1xf32>
    %396 = vector.broadcast %395 : vector<4x1xf32> to vector<4x5xf32>
    %397 = arith.subf %393, %396 : vector<4x5xf32>
    %398 = math.exp %397 : vector<4x5xf32>
    %399 = vector.extract_strided_slice %398 {offsets = [0, 0], sizes = [4, 1], strides = [1, 1]} : vector<4x5xf32> to vector<4x1xf32>
    %400 = vector.broadcast %399 : vector<4x1xf32> to vector<4x5xf32>
    %401 = vector.broadcast %165 : vector<1x5xf32> to vector<4x5xf32>
    %402 = arith.mulf %400, %401 : vector<4x5xf32>
    %403 = vector.extract_strided_slice %398 {offsets = [0, 1], sizes = [4, 1], strides = [1, 1]} : vector<4x5xf32> to vector<4x1xf32>
    %404 = vector.broadcast %403 : vector<4x1xf32> to vector<4x5xf32>
    %405 = vector.broadcast %166 : vector<1x5xf32> to vector<4x5xf32>
    %406 = arith.mulf %404, %405 : vector<4x5xf32>
    %407 = arith.addf %402, %406 : vector<4x5xf32>
    %408 = vector.extract_strided_slice %398 {offsets = [0, 2], sizes = [4, 1], strides = [1, 1]} : vector<4x5xf32> to vector<4x1xf32>
    %409 = vector.broadcast %408 : vector<4x1xf32> to vector<4x5xf32>
    %410 = vector.broadcast %167 : vector<1x5xf32> to vector<4x5xf32>
    %411 = arith.mulf %409, %410 : vector<4x5xf32>
    %412 = arith.addf %407, %411 : vector<4x5xf32>
    %413 = vector.extract_strided_slice %398 {offsets = [0, 3], sizes = [4, 1], strides = [1, 1]} : vector<4x5xf32> to vector<4x1xf32>
    %414 = vector.broadcast %413 : vector<4x1xf32> to vector<4x5xf32>
    %415 = vector.broadcast %168 : vector<1x5xf32> to vector<4x5xf32>
    %416 = arith.mulf %414, %415 : vector<4x5xf32>
    %417 = arith.addf %412, %416 : vector<4x5xf32>
    %418 = vector.extract_strided_slice %398 {offsets = [0, 4], sizes = [4, 1], strides = [1, 1]} : vector<4x5xf32> to vector<4x1xf32>
    %419 = vector.broadcast %418 : vector<4x1xf32> to vector<4x5xf32>
    %420 = vector.broadcast %169 : vector<1x5xf32> to vector<4x5xf32>
    %421 = arith.mulf %419, %420 : vector<4x5xf32>
    %422 = arith.addf %417, %421 : vector<4x5xf32>
    %423 = math.log %422 : vector<4x5xf32>
    %424 = vector.broadcast %395 : vector<4x1xf32> to vector<4x5xf32>
    %425 = arith.addf %423, %424 : vector<4x5xf32>
    %426 = vector.broadcast %161 : vector<1x5xf32> to vector<4x5xf32>
    %427 = arith.addf %425, %426 : vector<4x5xf32>
    %428 = vector.extract_strided_slice %159 {offsets = [0, 7, 0], sizes = [4, 1, 5], strides = [1, 1, 1]} : vector<4x8x5xf32> to vector<4x1x5xf32>
    %429 = vector.shape_cast %428 : vector<4x1x5xf32> to vector<4x5xf32>
    %430 = arith.addf %427, %429 : vector<4x5xf32>
    %cst_41 = arith.constant dense<0xFF800000> : vector<4xf32>
    %431 = vector.multi_reduction <maximumf>, %430, %cst_41 [1] : vector<4x5xf32> to vector<4xf32>
    %432 = vector.shape_cast %431 : vector<4xf32> to vector<4x1xf32>
    %433 = vector.broadcast %432 : vector<4x1xf32> to vector<4x5xf32>
    %434 = arith.subf %430, %433 : vector<4x5xf32>
    %435 = math.exp %434 : vector<4x5xf32>
    %cst_42 = arith.constant dense<0.000000e+00> : vector<4xf32>
    %436 = vector.multi_reduction <add>, %435, %cst_42 [1] : vector<4x5xf32> to vector<4xf32>
    %437 = vector.shape_cast %436 : vector<4xf32> to vector<4x1xf32>
    %438 = math.log %437 : vector<4x1xf32>
    %439 = arith.addf %438, %432 : vector<4x1xf32>
    %440 = vector.shape_cast %439 : vector<4x1xf32> to vector<1x4x1xf32>
    %cst_43 = arith.constant dense<0.000000e+00> : vector<1xf32>
    %441 = vector.multi_reduction <add>, %440, %cst_43 [1, 2] : vector<1x4x1xf32> to vector<1xf32>
    %442 = vector.shape_cast %441 : vector<1xf32> to vector<1x1x1xf32>
    %443 = vector.extract %442[0, 0, 0] : f32 from vector<1x1x1xf32>
    %444 = vector.broadcast %443 : f32 to vector<1x1xf32>
    %445 = arith.subf %444, %158 : vector<1x1xf32>
    %cst_44 = arith.constant 4.000000e+00 : f32
    %446 = vector.broadcast %cst_44 : f32 to vector<1x1xf32>
    %447 = arith.mulf %446, %445 : vector<1x1xf32>
    %c0_45 = arith.constant 0 : index
    %c0_46 = arith.constant 0 : index
    %448 = vector.load %arg10[%c0_45, %c0_46] : memref<1x1xf32, #tpu.memory_space<vmem>>, vector<1x1xf32>
    tpu.vector_store %arg10[%c0_45, %c0_46], %447 {strides = array<i32>} : memref<1x1xf32, #tpu.memory_space<vmem>>, vector<1x1xf32>,
    return
  }
  func.func @transform_0(%arg0: i32) -> (i32, i32) {
    %c0_i32 = arith.constant 0 : i32
    %c0_i32_0 = arith.constant 0 : i32
    %c0_i32_1 = arith.constant 0 : i32
    return %c0_i32, %c0_i32_0 : i32, i32
  }
  func.func @transform_1(%arg0: i32) -> (i32, i32) {
    %c0_i32 = arith.constant 0 : i32
    %c0_i32_0 = arith.constant 0 : i32
    %c0_i32_1 = arith.constant 0 : i32
    return %c0_i32, %c0_i32_0 : i32, i32
  }
  func.func @transform_2(%arg0: i32) -> (i32, i32) {
    %c0_i32 = arith.constant 0 : i32
    %c0_i32_0 = arith.constant 0 : i32
    %c0_i32_1 = arith.constant 0 : i32
    return %c0_i32, %c0_i32_0 : i32, i32
  }
  func.func @transform_3(%arg0: i32) -> (i32, i32) {
    %c0_i32 = arith.constant 0 : i32
    %c0_i32_0 = arith.constant 0 : i32
    %c0_i32_1 = arith.constant 0 : i32
    return %c0_i32, %c0_i32_0 : i32, i32
  }
  func.func @transform_4(%arg0: i32) -> (i32, i32) {
    %c0_i32 = arith.constant 0 : i32
    %c0_i32_0 = arith.constant 0 : i32
    %c0_i32_1 = arith.constant 0 : i32
    return %c0_i32, %c0_i32_0 : i32, i32
  }
  func.func @transform_5(%arg0: i32) -> (i32, i32) {
    %c0_i32 = arith.constant 0 : i32
    %c0_i32_0 = arith.constant 0 : i32
    %c0_i32_1 = arith.constant 0 : i32
    return %c0_i32, %c0_i32_0 : i32, i32
  }
  func.func @transform_6(%arg0: i32) -> (i32, i32) {
    %c0_i32 = arith.constant 0 : i32
    %c0_i32_0 = arith.constant 0 : i32
    %c0_i32_1 = arith.constant 0 : i32
    return %c0_i32, %c0_i32_0 : i32, i32
  }
  func.func @transform_7(%arg0: i32) -> (i32, i32) {
    %c0_i32 = arith.constant 0 : i32
    %c0_i32_0 = arith.constant 0 : i32
    %c0_i32_1 = arith.constant 0 : i32
    return %c0_i32, %c0_i32_0 : i32, i32
  }
  func.func @transform_8(%arg0: i32) -> (i32, i32) {
    %c0_i32 = arith.constant 0 : i32
    %c0_i32_0 = arith.constant 0 : i32
    %c0_i32_1 = arith.constant 0 : i32
    return %c0_i32, %c0_i32_0 : i32, i32
  }
  func.func @transform_9(%arg0: i32) -> (i32, i32) {
    %c0_i32 = arith.constant 0 : i32
    %c0_i32_0 = arith.constant 0 : i32
    %c0_i32_1 = arith.constant 0 : i32
    return %c0_i32, %c0_i32_0 : i32, i32
  }
}

</mosaic_0001>

<llo_original>
// kernel: tpu_custom_call.1
$region0: #{tpu_custom_call.1}
  #allocation0 [shape = 'u32[]', space=smem, size = 0x4, offset = 0x4, fixed_abs, tag = 'smem constant byte address 0x4 - core index']
  #allocation1 [shape = 'u32[72,128]{1,0:T(1,128)}', space=vmem, size = 0x9000, scoped, tag = 'internal scratch']
  %s0 = inlined_call_operand.vmem [shape: s32[32,1], index: 0, kind: input, shape index: {}]
  %s1 = inlined_call_operand.vmem [shape: s32[32,1], index: 1, kind: input, shape index: {}]
  %s2 = inlined_call_operand.hbm [shape: f32[50,64], index: 2, kind: input, shape index: {}]
  %s3 = inlined_call_operand.vmem [shape: f32[64,128], index: 3, kind: input, shape index: {}]
  %s4 = inlined_call_operand.vmem [shape: f32[32,128], index: 4, kind: input, shape index: {}]
  %s5 = inlined_call_operand.hbm [shape: f32[1,128], index: 5, kind: input, shape index: {}]
  %s6 = inlined_call_operand.vmem [shape: f32[32,5], index: 6, kind: input, shape index: {}]
  %s7 = inlined_call_operand.hbm [shape: f32[1,5], index: 7, kind: input, shape index: {}]
  %s8 = inlined_call_operand.vmem [shape: f32[5,5], index: 8, kind: input, shape index: {}]
  %s9 = inlined_call_operand.hbm [shape: f32[1,1], index: 9, kind: output, shape index: {}]
  %s10 = sld [smem:[#allocation0]]
  $region58: #{tpu_custom_call.1} parent=0
    _
  %s12 = ssub.s32 1, %s10
  %s13 = scalar_select 0, %s12, %s10
  $region1: #{tpu_custom_call.1} parent=0
    #allocation2 [shape = 'u8[28672]{0}', space=vmem, size = 0x7000, scoped, tag = 'input window, operand 2, single buffered']
    #allocation3 [shape = 's32[1]{0}', space=sflag, size = 0x4, scoped, tag = 'scoped memory for tpu_custom_call.1']
    #allocation4 [shape = 's32[1]{0}', space=sflag, size = 0x4, scoped, tag = 'scoped memory for tpu_custom_call.1']
    #allocation5 [shape = 'u8[512]{0}', space=vmem, size = 0x400, scoped, tag = 'input window, operand 5, single buffered']
    #allocation6 [shape = 's32[1]{0}', space=sflag, size = 0x4, scoped, tag = 'scoped memory for tpu_custom_call.1']
    #allocation7 [shape = 'u8[512]{0}', space=vmem, size = 0x400, scoped, tag = 'input window, operand 7, single buffered']
    #allocation8 [shape = 'u8[512]{0}', space=vmem, size = 0x400, scoped, tag = 'output window, operand 0, single buffered']
    %14 = vsyncpa [#allocation3], 0
    %15 = vsyncpa [#allocation6], 0
    %16 = vsyncpa [#allocation4], 0
    // Predicated region
    $region2: #{tpu_custom_call.1} parent=1 // pred_check
      _
    $region3: #{tpu_custom_call.1} parent=1 // pred_check_branch
      %18 = sbr.rel (0) target = $region5
    $region4: #{tpu_custom_call.1} parent=1 // pred_region
      _
    $region5: #{tpu_custom_call.1} parent=1 // pred_fallthru
      _
    // Predicated region
    $region6: #{tpu_custom_call.1} parent=1 // pred_check
      _
    $region7: #{tpu_custom_call.1} parent=1 // pred_check_branch
      %20 = sbr.rel (0) target = $region9
    $region8: #{tpu_custom_call.1} parent=1 // pred_region
      _
    $region9: #{tpu_custom_call.1} parent=1 // pred_fallthru
      _
    // Predicated region
    $region10: #{tpu_custom_call.1} parent=1 // pred_check
      _
    $region11: #{tpu_custom_call.1} parent=1 // pred_check_branch
      %22 = sbr.rel (0) target = $region13
    $region12: #{tpu_custom_call.1} parent=1 // pred_region
      %24 = vsyncadd [#allocation3], 0
      %s25 = sshll.u32 %s2, 4
      %s26 = int_to_ptr.hbm [resolvable:$true] %s25
      %s27 = sshll.u32 [#allocation2], 4
      %s28 = int_to_ptr.vmem [resolvable:$true] %s27
      %33 = dma.hbm_to_vmem [thread:$0]  %s26, 896, %s28, [#allocation3], 128, 128, 8
    $region13: #{tpu_custom_call.1} parent=1 // pred_fallthru
      _
    // Predicated region
    $region14: #{tpu_custom_call.1} parent=1 // pred_check
      _
    $region15: #{tpu_custom_call.1} parent=1 // pred_check_branch
      %35 = sbr.rel (0) target = $region17
    $region16: #{tpu_custom_call.1} parent=1 // pred_region
      _
    $region17: #{tpu_custom_call.1} parent=1 // pred_fallthru
      _
    // Predicated region
    $region18: #{tpu_custom_call.1} parent=1 // pred_check
      _
    $region19: #{tpu_custom_call.1} parent=1 // pred_check_branch
      %37 = sbr.rel (0) target = $region21
    $region20: #{tpu_custom_call.1} parent=1 // pred_region
      _
    $region21: #{tpu_custom_call.1} parent=1 // pred_fallthru
      _
    // Predicated region
    $region22: #{tpu_custom_call.1} parent=1 // pred_check
      _
    $region23: #{tpu_custom_call.1} parent=1 // pred_check_branch
      %39 = sbr.rel (0) target = $region25
    $region24: #{tpu_custom_call.1} parent=1 // pred_region
      %41 = vsyncadd [#allocation6], 0
      %s43 = sshll.u32 %s5, 4
      %s44 = int_to_ptr.hbm [resolvable:$true] %s43
      %s45 = sshll.u32 [#allocation5], 4
      %s46 = int_to_ptr.vmem [resolvable:$true] %s45
      %48 = dma.hbm_to_vmem [thread:$0]  %s44, 16, %s46, [#allocation6]
    $region25: #{tpu_custom_call.1} parent=1 // pred_fallthru
      _
    // Predicated region
    $region26: #{tpu_custom_call.1} parent=1 // pred_check
      _
    $region27: #{tpu_custom_call.1} parent=1 // pred_check_branch
      %50 = sbr.rel (0) target = $region29
    $region28: #{tpu_custom_call.1} parent=1 // pred_region
      _
    $region29: #{tpu_custom_call.1} parent=1 // pred_fallthru
      _
    // Predicated region
    $region30: #{tpu_custom_call.1} parent=1 // pred_check
      _
    $region31: #{tpu_custom_call.1} parent=1 // pred_check_branch
      %52 = sbr.rel (0) target = $region33
    $region32: #{tpu_custom_call.1} parent=1 // pred_region
      %54 = vsyncadd [#allocation6], 0
      %s56 = sshll.u32 %s7, 4
      %s57 = int_to_ptr.hbm [resolvable:$true] %s56
      %s58 = sshll.u32 [#allocation7], 4
      %s59 = int_to_ptr.vmem [resolvable:$true] %s58
      %61 = dma.hbm_to_vmem [thread:$0]  %s57, 16, %s59, [#allocation6]
    $region33: #{tpu_custom_call.1} parent=1 // pred_fallthru
      _
    // Predicated region
    $region34: #{tpu_custom_call.1} parent=1 // pred_check
      _
    $region35: #{tpu_custom_call.1} parent=1 // pred_check_branch
      %63 = sbr.rel (0) target = $region37
    $region36: #{tpu_custom_call.1} parent=1 // pred_region
      _
    $region37: #{tpu_custom_call.1} parent=1 // pred_fallthru
      _
    // Predicated region
    $region38: #{tpu_custom_call.1} parent=1 // pred_check
      _
    $region39: #{tpu_custom_call.1} parent=1 // pred_check_branch
      %65 = sbr.rel (0) target = $region41
    $region40: #{tpu_custom_call.1} parent=1 // pred_region
      %67 = dma.done [#allocation3], 896
    $region41: #{tpu_custom_call.1} parent=1 // pred_fallthru
      _
    // Predicated region
    $region42: #{tpu_custom_call.1} parent=1 // pred_check
      _
    $region43: #{tpu_custom_call.1} parent=1 // pred_check_branch
      %69 = sbr.rel (0) target = $region45
    $region44: #{tpu_custom_call.1} parent=1 // pred_region
      %71 = dma.done [#allocation6], 16
    $region45: #{tpu_custom_call.1} parent=1 // pred_fallthru
      _
    // Predicated region
    $region46: #{tpu_custom_call.1} parent=1 // pred_check
      _
    $region47: #{tpu_custom_call.1} parent=1 // pred_check_branch
      %73 = sbr.rel (0) target = $region49
    $region48: #{tpu_custom_call.1} parent=1 // pred_region
      %75 = dma.done [#allocation6], 16
    $region49: #{tpu_custom_call.1} parent=1 // pred_fallthru
      _
    %v76 = vld [vmem:[%s0] sm:$0xff]
    %v77 = vld [vmem:[%s0 + $0x8] sm:$0xff]
    %v78 = vld [vmem:[%s0 + $0x10] sm:$0xff]
    %v79 = vld [vmem:[%s0 + $0x18] sm:$0xff]
    %v80 = vlaneseq
    %v81 = vand.u32 %v80, 127
    %82 = vset.pattern.permute.xlu0 0
    %83 = vperm.xlu0 %82, %v76
    %v84 = vpop.permute.xlu0 %83
    %85 = vset.pattern.permute.xlu0 0
    %86 = vperm.xlu0 %85, %v77
    %v87 = vpop.permute.xlu0 %86
    %88 = vset.pattern.permute.xlu0 0
    %89 = vperm.xlu0 %88, %v78
    %v90 = vpop.permute.xlu0 %89
    %91 = vset.pattern.permute.xlu0 0
    %92 = vperm.xlu0 %91, %v79
    %v93 = vpop.permute.xlu0 %92
    %vm94 = vcmp.eq.s32.totalorder %v84, %v81
    %vm95 = vcmp.eq.s32.totalorder %v87, %v81
    %vm96 = vcmp.eq.s32.totalorder %v90, %v81
    %vm97 = vcmp.eq.s32.totalorder %v93, %v81
    %v98 = vsel %vm94, 1, 0
    %v99 = vsel %vm95, 1, 0
    %v100 = vsel %vm96, 1, 0
    %v101 = vsel %vm97, 1, 0
    %v102 = vcvt.s32.f32 %v98
    %v103 = vcvt.s32.f32 %v99
    %v104 = vcvt.s32.f32 %v100
    %v105 = vcvt.s32.f32 %v101
    %v106 = vld [vmem:[#allocation2] sm:$0xff]
    %v107 = vld [vmem:[#allocation2 + $0x8] sm:$0xff]
    %v108 = vld [vmem:[#allocation2 + $0x10] sm:$0xff]
    %v109 = vld [vmem:[#allocation2 + $0x18] sm:$0xff]
    %v110 = vld [vmem:[#allocation2 + $0x20] sm:$0xff]
    %v111 = vld [vmem:[#allocation2 + $0x28] sm:$0xff]
    %v112 = vld [vmem:[#allocation2 + $0x30] sm:$0x3]
    %vm113 = vcmask 408576
    %v115 = vsel %vm113, %v102, 0
    %v118 = vsel %vm113, %v103, 0
    %v121 = vsel %vm113, %v104, 0
    %v124 = vsel %vm113, %v105, 0
    %vm126 = vcmask 1041408
    %v128 = vsel %vm126, %v112, 0
    %130 = vmatpush.msra.mxu0 0.0
    %131 = vmatpush.msra.mxu0 0.0
    %132 = vmatpush.msra.mxu0 0.0
    %133 = vmatpush.msra.mxu0 0.0
    %134 = vmatpush.msra.mxu0 0.0
    %135 = vmatpush.msra.mxu0 0.0
    %136 = vmatpush.msra.mxu0 0.0
    %137 = vmatpush.msra.mxu0 0.0
    %138 = vmatpush.msra.mxu0 0.0
    %139 = vmatpush.msra.mxu0 %v128
    %140 = vmatpush.msra.mxu0 %v111
    %141 = vmatpush.msra.mxu0 %v110
    %142 = vmatpush.msra.mxu0 %v109
    %143 = vmatpush.msra.mxu0 %v108
    %144 = vmatpush.msra.mxu0 %v107
    %145 = vmatpush.msra.mxu0 %v106
    %146 = vmatmul.f32.gmra.mxu0 %v115
    %v147 = vpop.f32.mrf.mxu0
    %v148 = vadd.f32 0.0, %v147
    %149 = vmatmul.f32.gmra.mxu0 %v118
    %v150 = vpop.f32.mrf.mxu0
    %v151 = vadd.f32 0.0, %v150
    %152 = vmatmul.f32.gmra.mxu0 %v121
    %v153 = vpop.f32.mrf.mxu0
    %v154 = vadd.f32 0.0, %v153
    %155 = vmatmul.f32.gmra.mxu0 %v124
    %v156 = vpop.f32.mrf.mxu0
    %v157 = vadd.f32 0.0, %v156
    %158 = vdwg.mxu0
    %v159 = vld [vmem:[%s3] sm:$0xff]
    %v160 = vld [vmem:[%s3 + $0x8] sm:$0xff]
    %v161 = vld [vmem:[%s3 + $0x10] sm:$0xff]
    %v162 = vld [vmem:[%s3 + $0x18] sm:$0xff]
    %v163 = vld [vmem:[%s3 + $0x20] sm:$0xff]
    %v164 = vld [vmem:[%s3 + $0x28] sm:$0xff]
    %v165 = vld [vmem:[%s3 + $0x30] sm:$0xff]
    %v166 = vld [vmem:[%s3 + $0x38] sm:$0xff]
    %v167 = vld [vmem:[#allocation5] sm:$0x1]
    %v169 = vperm.slane %v167, 0
    %vm171 = vcmask 523264
    %v173 = vsel %vm171, %v148, 0
    %v176 = vsel %vm171, %v151, 0
    %v179 = vsel %vm171, %v154, 0
    %v182 = vsel %vm171, %v157, 0
    %184 = vmatpush.msra.mxu0 0.0
    %185 = vmatpush.msra.mxu0 0.0
    %186 = vmatpush.msra.mxu0 0.0
    %187 = vmatpush.msra.mxu0 0.0
    %188 = vmatpush.msra.mxu0 0.0
    %189 = vmatpush.msra.mxu0 0.0
    %190 = vmatpush.msra.mxu0 0.0
    %191 = vmatpush.msra.mxu0 0.0
    %192 = vmatpush.msra.mxu0 %v166
    %193 = vmatpush.msra.mxu0 %v165
    %194 = vmatpush.msra.mxu0 %v164
    %195 = vmatpush.msra.mxu0 %v163
    %196 = vmatpush.msra.mxu0 %v162
    %197 = vmatpush.msra.mxu0 %v161
    %198 = vmatpush.msra.mxu0 %v160
    %199 = vmatpush.msra.mxu0 %v159
    %200 = vmatmul.f32.gmra.mxu0 %v173
    %v201 = vpop.f32.mrf.mxu0
    %v202 = vadd.f32 %v169, %v201
    %203 = vmatmul.f32.gmra.mxu0 %v176
    %v204 = vpop.f32.mrf.mxu0
    %v205 = vadd.f32 %v169, %v204
    %206 = vmatmul.f32.gmra.mxu0 %v179
    %v207 = vpop.f32.mrf.mxu0
    %v208 = vadd.f32 %v169, %v207
    %209 = vmatmul.f32.gmra.mxu0 %v182
    %v210 = vpop.f32.mrf.mxu0
    %v211 = vadd.f32 %v169, %v210
    %212 = vdwg.mxu0
    %v213 = vld [vmem:[%s4] sm:$0xff]
    %v214 = vld [vmem:[%s4 + $0x8] sm:$0xff]
    %v215 = vld [vmem:[%s4 + $0x10] sm:$0xff]
    %v216 = vld [vmem:[%s4 + $0x18] sm:$0xff]
    %vm217 = vcmask 261120
    %v219 = vsel %vm217, 0.0, 0
    %221 = vmatpush.msra.mxu0 0.0
    %222 = vmatpush.msra.mxu0 0.0
    %223 = vmatpush.msra.mxu0 0.0
    %224 = vmatpush.msra.mxu0 0.0
    %225 = vmatpush.msra.mxu0 0.0
    %226 = vmatpush.msra.mxu0 0.0
    %227 = vmatpush.msra.mxu0 0.0
    %228 = vmatpush.msra.mxu0 0.0
    %229 = vmatpush.msra.mxu0 0.0
    %230 = vmatpush.msra.mxu0 0.0
    %231 = vmatpush.msra.mxu0 0.0
    %232 = vmatpush.msra.mxu0 0.0
    %233 = vmatpush.msra.mxu0 %v216
    %234 = vmatpush.msra.mxu0 %v215
    %235 = vmatpush.msra.mxu0 %v214
    %236 = vmatpush.msra.mxu0 %v213
    %237 = vmatmul.f32.gmra.mxu0 %v219
    %v238 = vpop.f32.mrf.mxu0
    %v239 = vadd.f32 0.0, %v238
    %240 = vdwg.mxu0
    %v241 = vadd.f32 %v202, %v239
    %v242 = vxor.u32 %v241, 2147483648
    %v243 = vmul.f32 %v242, 1.442695
    %v244 = vpow.pop %v243
    %v245 = vadd.f32 %v244, 1.0
    %v246 = vrcp.pop %v245
    %v247 = vmul.f32 %v245, %v246
    %v248 = vsub.f32 1.0, %v247
    %v249 = vmul.f32 %v246, %v248
    %v250 = vadd.f32 %v246, %v249
    %vm251 = vweird.f32 %v245
    %vm252 = vweird.f32 %v246
    %vm253 = vmor %vm251, %vm252
    %v254 = vsel %vm253, %v246, %v250
    %v255 = vand.u32 2147483647, %v245
    %vm256 = vcmp.eq.f32.partialorder %v255, 8.507059e+37
    %v257 = vand.u32 %v245, 2147483648
    %v258 = vor.u32 1.1754944e-38, %v257
    %v259 = vsel %vm256, %v258, %v254
    %v260 = vmul.f32 1.0, %v259
    %v261 = vtanh.pop %v241
    %v262 = vmul.f32 %v260, 0.0
    %264 = vrot.lane.b32.xlu0 %v261, 64
    %v265 = vpop.permute.xlu0 %264
    %v267 = vmul.f32 %v260, %v265
    %269 = vrot.lane.b32.xlu0 %v267, 32
    %v270 = vpop.permute.xlu0 %269
    %v272 = vadd.f32 %v262, %v270
    %v273 = vtanh.pop %v272
    %275 = vrot.lane.b32.xlu0 %v273, 64
    %v276 = vpop.permute.xlu0 %275
    %v278 = vmul.f32 %v260, %v276
    %280 = vrot.lane.b32.xlu0 %v278, 32
    %v281 = vpop.permute.xlu0 %280
    %v282 = vsel %vm217, %v281, 0
    %284 = vmatpush.msra.mxu0 0.0
    %285 = vmatpush.msra.mxu0 0.0
    %286 = vmatpush.msra.mxu0 0.0
    %287 = vmatpush.msra.mxu0 0.0
    %288 = vmatpush.msra.mxu0 0.0
    %289 = vmatpush.msra.mxu0 0.0
    %290 = vmatpush.msra.mxu0 0.0
    %291 = vmatpush.msra.mxu0 0.0
    %292 = vmatpush.msra.mxu0 0.0
    %293 = vmatpush.msra.mxu0 0.0
    %294 = vmatpush.msra.mxu0 0.0
    %295 = vmatpush.msra.mxu0 0.0
    %296 = vmatpush.msra.mxu0 %v216
    %297 = vmatpush.msra.mxu0 %v215
    %298 = vmatpush.msra.mxu0 %v214
    %299 = vmatpush.msra.mxu0 %v213
    %300 = vmatmul.f32.gmra.mxu0 %v282
    %v301 = vpop.f32.mrf.mxu0
    %v302 = vadd.f32 0.0, %v301
    %303 = vdwg.mxu0
    %v304 = vadd.f32 %v205, %v302
    %v305 = vxor.u32 %v304, 2147483648
    %v306 = vmul.f32 %v305, 1.442695
    %v307 = vpow.pop %v306
    %v308 = vadd.f32 %v307, 1.0
    %v309 = vrcp.pop %v308
    %v310 = vmul.f32 %v308, %v309
    %v311 = vsub.f32 1.0, %v310
    %v312 = vmul.f32 %v309, %v311
    %v313 = vadd.f32 %v309, %v312
    %vm314 = vweird.f32 %v308
    %vm315 = vweird.f32 %v309
    %vm316 = vmor %vm314, %vm315
    %v317 = vsel %vm316, %v309, %v313
    %v318 = vand.u32 2147483647, %v308
    %vm319 = vcmp.eq.f32.partialorder %v318, 8.507059e+37
    %v320 = vand.u32 %v308, 2147483648
    %v321 = vor.u32 1.1754944e-38, %v320
    %v322 = vsel %vm319, %v321, %v317
    %v323 = vmul.f32 1.0, %v322
    %v324 = vtanh.pop %v304
    %v325 = vmul.f32 %v323, %v272
    %327 = vrot.lane.b32.xlu0 %v324, 64
    %v328 = vpop.permute.xlu0 %327
    %v330 = vmul.f32 %v323, %v328
    %332 = vrot.lane.b32.xlu0 %v330, 32
    %v333 = vpop.permute.xlu0 %332
    %v335 = vadd.f32 %v325, %v333
    %v336 = vtanh.pop %v335
    %338 = vrot.lane.b32.xlu0 %v336, 64
    %v339 = vpop.permute.xlu0 %338
    %v341 = vmul.f32 %v323, %v339
    %343 = vrot.lane.b32.xlu0 %v341, 32
    %v344 = vpop.permute.xlu0 %343
    %v345 = vsel %vm217, %v344, 0
    %347 = vmatpush.msra.mxu0 0.0
    %348 = vmatpush.msra.mxu0 0.0
    %349 = vmatpush.msra.mxu0 0.0
    %350 = vmatpush.msra.mxu0 0.0
    %351 = vmatpush.msra.mxu0 0.0
    %352 = vmatpush.msra.mxu0 0.0
    %353 = vmatpush.msra.mxu0 0.0
    %354 = vmatpush.msra.mxu0 0.0
    %355 = vmatpush.msra.mxu0 0.0
    %356 = vmatpush.msra.mxu0 0.0
    %357 = vmatpush.msra.mxu0 0.0
    %358 = vmatpush.msra.mxu0 0.0
    %359 = vmatpush.msra.mxu0 %v216
    %360 = vmatpush.msra.mxu0 %v215
    %361 = vmatpush.msra.mxu0 %v214
    %362 = vmatpush.msra.mxu0 %v213
    %363 = vmatmul.f32.gmra.mxu0 %v345
    %v364 = vpop.f32.mrf.mxu0
    %v365 = vadd.f32 0.0, %v364
    %366 = vdwg.mxu0
    %v367 = vadd.f32 %v208, %v365
    %v368 = vxor.u32 %v367, 2147483648
    %v369 = vmul.f32 %v368, 1.442695
    %v370 = vpow.pop %v369
    %v371 = vadd.f32 %v370, 1.0
    %v372 = vrcp.pop %v371
    %v373 = vmul.f32 %v371, %v372
    %v374 = vsub.f32 1.0, %v373
    %v375 = vmul.f32 %v372, %v374
    %v376 = vadd.f32 %v372, %v375
    %vm377 = vweird.f32 %v371
    %vm378 = vweird.f32 %v372
    %vm379 = vmor %vm377, %vm378
    %v380 = vsel %vm379, %v372, %v376
    %v381 = vand.u32 2147483647, %v371
    %vm382 = vcmp.eq.f32.partialorder %v381, 8.507059e+37
    %v383 = vand.u32 %v371, 2147483648
    %v384 = vor.u32 1.1754944e-38, %v383
    %v385 = vsel %vm382, %v384, %v380
    %v386 = vmul.f32 1.0, %v385
    %v387 = vtanh.pop %v367
    %v388 = vmul.f32 %v386, %v335
    %390 = vrot.lane.b32.xlu0 %v387, 64
    %v391 = vpop.permute.xlu0 %390
    %v393 = vmul.f32 %v386, %v391
    %395 = vrot.lane.b32.xlu0 %v393, 32
    %v396 = vpop.permute.xlu0 %395
    %v398 = vadd.f32 %v388, %v396
    %v399 = vtanh.pop %v398
    %401 = vrot.lane.b32.xlu0 %v399, 64
    %v402 = vpop.permute.xlu0 %401
    %v404 = vmul.f32 %v386, %v402
    %406 = vrot.lane.b32.xlu0 %v404, 32
    %v407 = vpop.permute.xlu0 %406
    %v408 = vsel %vm217, %v407, 0
    %410 = vmatpush.msra.mxu0 0.0
    %411 = vmatpush.msra.mxu0 0.0
    %412 = vmatpush.msra.mxu0 0.0
    %413 = vmatpush.msra.mxu0 0.0
    %414 = vmatpush.msra.mxu0 0.0
    %415 = vmatpush.msra.mxu0 0.0
    %416 = vmatpush.msra.mxu0 0.0
    %417 = vmatpush.msra.mxu0 0.0
    %418 = vmatpush.msra.mxu0 0.0
    %419 = vmatpush.msra.mxu0 0.0
    %420 = vmatpush.msra.mxu0 0.0
    %421 = vmatpush.msra.mxu0 0.0
    %422 = vmatpush.msra.mxu0 %v216
    %423 = vmatpush.msra.mxu0 %v215
    %424 = vmatpush.msra.mxu0 %v214
    %425 = vmatpush.msra.mxu0 %v213
    %426 = vmatmul.f32.gmra.mxu0 %v408
    %v427 = vpop.f32.mrf.mxu0
    %v428 = vadd.f32 0.0, %v427
    %429 = vdwg.mxu0
    %v430 = vadd.f32 %v211, %v428
    %v431 = vxor.u32 %v430, 2147483648
    %v432 = vmul.f32 %v431, 1.442695
    %v433 = vpow.pop %v432
    %v434 = vadd.f32 %v433, 1.0
    %v435 = vrcp.pop %v434
    %v436 = vmul.f32 %v434, %v435
    %v437 = vsub.f32 1.0, %v436
    %v438 = vmul.f32 %v435, %v437
    %v439 = vadd.f32 %v435, %v438
    %vm440 = vweird.f32 %v434
    %vm441 = vweird.f32 %v435
    %vm442 = vmor %vm440, %vm441
    %v443 = vsel %vm442, %v435, %v439
    %v444 = vand.u32 2147483647, %v434
    %vm445 = vcmp.eq.f32.partialorder %v444, 8.507059e+37
    %v446 = vand.u32 %v434, 2147483648
    %v447 = vor.u32 1.1754944e-38, %v446
    %v448 = vsel %vm445, %v447, %v443
    %v449 = vmul.f32 1.0, %v448
    %v450 = vtanh.pop %v430
    %v451 = vmul.f32 %v449, %v398
    %453 = vrot.lane.b32.xlu0 %v450, 64
    %v454 = vpop.permute.xlu0 %453
    %v456 = vmul.f32 %v449, %v454
    %458 = vrot.lane.b32.xlu0 %v456, 32
    %v459 = vpop.permute.xlu0 %458
    %v461 = vadd.f32 %v451, %v459
    %v462 = vtanh.pop %v461
    %464 = vrot.lane.b32.xlu0 %v462, 64
    %v465 = vpop.permute.xlu0 %464
    %v467 = vmul.f32 %v449, %v465
    %v468 = vld [vmem:[%s6] sm:$0xff]
    %v469 = vld [vmem:[%s6 + $0x8] sm:$0xff]
    %v470 = vld [vmem:[%s6 + $0x10] sm:$0xff]
    %v471 = vld [vmem:[%s6 + $0x18] sm:$0xff]
    %v472 = vld [vmem:[#allocation7] sm:$0x1]
    %v474 = vperm.slane %v472, 0
    %477 = vrot.lane.b32.xlu0 %v467, 32
    %v478 = vpop.permute.xlu0 %477
    %v479 = vsel %vm217, %v478, 0
    %481 = vmatpush.msra.mxu0 0.0
    %482 = vmatpush.msra.mxu0 0.0
    %483 = vmatpush.msra.mxu0 0.0
    %484 = vmatpush.msra.mxu0 0.0
    %485 = vmatpush.msra.mxu0 0.0
    %486 = vmatpush.msra.mxu0 0.0
    %487 = vmatpush.msra.mxu0 0.0
    %488 = vmatpush.msra.mxu0 0.0
    %489 = vmatpush.msra.mxu0 0.0
    %490 = vmatpush.msra.mxu0 0.0
    %491 = vmatpush.msra.mxu0 0.0
    %492 = vmatpush.msra.mxu0 0.0
    %493 = vmatpush.msra.mxu0 %v471
    %494 = vmatpush.msra.mxu0 %v470
    %495 = vmatpush.msra.mxu0 %v469
    %496 = vmatpush.msra.mxu0 %v468
    %497 = vmatmul.f32.gmra.mxu0 %v282
    %v498 = vpop.f32.mrf.mxu0
    %v499 = vadd.f32 %v474, %v498
    %500 = vmatmul.f32.gmra.mxu0 %v345
    %v501 = vpop.f32.mrf.mxu0
    %v502 = vadd.f32 %v474, %v501
    %503 = vmatmul.f32.gmra.mxu0 %v408
    %v504 = vpop.f32.mrf.mxu0
    %v505 = vadd.f32 %v474, %v504
    %506 = vmatmul.f32.gmra.mxu0 %v479
    %v507 = vpop.f32.mrf.mxu0
    %v508 = vadd.f32 %v474, %v507
    %509 = vdwg.mxu0
    %v510 = vld [vmem:[%s8] sm:$0x1f]
    %v511 = vld [vmem:[%s1] sm:$0xff]
    %v512 = vld [vmem:[%s1 + $0x8] sm:$0xff]
    %v513 = vld [vmem:[%s1 + $0x10] sm:$0xff]
    %v514 = vld [vmem:[%s1 + $0x18] sm:$0xff]
    %515 = vset.pattern.permute.xlu0 0
    %516 = vperm.xlu0 %515, %v511
    %v517 = vpop.permute.xlu0 %516
    %518 = vset.pattern.permute.xlu0 0
    %519 = vperm.xlu0 %518, %v512
    %v520 = vpop.permute.xlu0 %519
    %521 = vset.pattern.permute.xlu0 0
    %522 = vperm.xlu0 %521, %v513
    %v523 = vpop.permute.xlu0 %522
    %524 = vset.pattern.permute.xlu0 0
    %525 = vperm.xlu0 %524, %v514
    %v526 = vpop.permute.xlu0 %525
    %vm527 = vcmp.eq.s32.totalorder %v517, %v81
    %vm528 = vcmp.eq.s32.totalorder %v520, %v81
    %vm529 = vcmp.eq.s32.totalorder %v523, %v81
    %vm530 = vcmp.eq.s32.totalorder %v526, %v81
    %v531 = vsel %vm527, 1, 0
    %v532 = vsel %vm528, 1, 0
    %v533 = vsel %vm529, 1, 0
    %v534 = vsel %vm530, 1, 0
    %v535 = vcvt.s32.f32 %v531
    %v536 = vcvt.s32.f32 %v532
    %v537 = vcvt.s32.f32 %v533
    %v538 = vcvt.s32.f32 %v534
    %v539 = vmul.f32 %v499, %v535
    %v540 = vmul.f32 %v502, %v536
    %v541 = vmul.f32 %v505, %v537
    %v542 = vmul.f32 %v508, %v538
    %vm543 = vcmask 39936
    %v544 = vsel %vm543, %v539, 0.0
    %v545 = vsel %vm543, %v540, 0.0
    %v546 = vadd.f32 %v544, %v545
    %v547 = vsel %vm543, %v541, 0.0
    %v548 = vadd.f32 %v546, %v547
    %v549 = vsel %vm543, %v542, 0.0
    %v550 = vadd.f32 %v548, %v549
    %551 = vadd.xlane.f32.xlu0 %v550
    %v552 = vpop.xlane.xlu0 %551
    %v553 = vrot.slane %v552, 4
    %v554 = vadd.f32 %v552, %v553
    %v555 = vrot.slane %v554, 2
    %v556 = vadd.f32 %v554, %v555
    %v557 = vrot.slane %v556, 1
    %v558 = vadd.f32 %v556, %v557
    %s559 = vtos %v558
    %v560 = vstv %s559
    %v562 = vsel %vm543, %v535, 0
    %v565 = vsel %vm543, %v536, 0
    %v568 = vsel %vm543, %v537, 0
    %v571 = vsel %vm543, %v538, 0
    %vm573 = vcmask 1044480
    %v575 = vsel %vm573, %v510, 0
    %577 = vmatpush.msra.mxu0 0.0
    %578 = vmatpush.msra.mxu0 0.0
    %579 = vmatpush.msra.mxu0 0.0
    %580 = vmatpush.msra.mxu0 0.0
    %581 = vmatpush.msra.mxu0 0.0
    %582 = vmatpush.msra.mxu0 0.0
    %583 = vmatpush.msra.mxu0 0.0
    %584 = vmatpush.msra.mxu0 0.0
    %585 = vmatpush.msra.mxu0 0.0
    %586 = vmatpush.msra.mxu0 0.0
    %587 = vmatpush.msra.mxu0 0.0
    %588 = vmatpush.msra.mxu0 0.0
    %589 = vmatpush.msra.mxu0 0.0
    %590 = vmatpush.msra.mxu0 0.0
    %591 = vmatpush.msra.mxu0 0.0
    %592 = vmatpush.msra.mxu0 %v575
    %593 = vmatmul.f32.gmra.mxu0 %v562
    %v594 = vpop.f32.mrf.mxu0
    %v595 = vadd.f32 0.0, %v594
    %596 = vmatmul.f32.gmra.mxu0 %v565
    %v597 = vpop.f32.mrf.mxu0
    %v598 = vadd.f32 0.0, %v597
    %599 = vmatmul.f32.gmra.mxu0 %v568
    %v600 = vpop.f32.mrf.mxu0
    %v601 = vadd.f32 0.0, %v600
    %602 = vmatmul.f32.gmra.mxu0 %v571
    %v603 = vpop.f32.mrf.mxu0
    %v604 = vadd.f32 0.0, %v603
    %605 = vdwg.mxu0
    %v606 = vrot.slane %v535, 1
    %v607 = vrot.slane %v536, 1
    %v608 = vrot.slane %v537, 1
    %v609 = vrot.slane %v538, 1
    %v614 = vmul.f32 %v595, %v606
    %v615 = vmul.f32 %v598, %v607
    %v616 = vmul.f32 %v601, %v608
    %v617 = vmul.f32 %v604, %v609
    %v618 = vadd.f32 %v614, 0.0
    %v619 = vadd.f32 %v615, 0.0
    %v620 = vadd.f32 %v616, 0.0
    %v621 = vadd.f32 %v617, 0.0
    %v626 = vrot.slane %v614, 1
    %v627 = vrot.slane %v615, 1
    %v628 = vrot.slane %v616, 1
    %v629 = vrot.slane %v617, 1
    %v634 = vadd.f32 %v618, %v626
    %v635 = vadd.f32 %v619, %v627
    %v636 = vadd.f32 %v620, %v628
    %v637 = vadd.f32 %v621, %v629
    %v638 = vrot.slane %v614, 2
    %v639 = vrot.slane %v615, 2
    %v640 = vrot.slane %v616, 2
    %v641 = vrot.slane %v617, 2
    %v646 = vadd.f32 %v634, %v638
    %v647 = vadd.f32 %v635, %v639
    %v648 = vadd.f32 %v636, %v640
    %v649 = vadd.f32 %v637, %v641
    %v650 = vrot.slane %v614, 3
    %v651 = vrot.slane %v615, 3
    %v652 = vrot.slane %v616, 3
    %v653 = vrot.slane %v617, 3
    %v658 = vadd.f32 %v646, %v650
    %v659 = vadd.f32 %v647, %v651
    %v660 = vadd.f32 %v648, %v652
    %v661 = vadd.f32 %v649, %v653
    %v662 = vrot.slane %v614, 4
    %v663 = vrot.slane %v615, 4
    %v664 = vrot.slane %v616, 4
    %v665 = vrot.slane %v617, 4
    %v670 = vadd.f32 %v658, %v662
    %v671 = vadd.f32 %v659, %v663
    %v672 = vadd.f32 %v660, %v664
    %v673 = vadd.f32 %v661, %v665
    %v674 = vrot.slane %v614, 5
    %v675 = vrot.slane %v615, 5
    %v676 = vrot.slane %v616, 5
    %v677 = vrot.slane %v617, 5
    %v682 = vadd.f32 %v670, %v674
    %v683 = vadd.f32 %v671, %v675
    %v684 = vadd.f32 %v672, %v676
    %v685 = vadd.f32 %v673, %v677
    %v686 = vrot.slane %v614, 6
    %v687 = vrot.slane %v615, 6
    %v688 = vrot.slane %v616, 6
    %v689 = vrot.slane %v617, 6
    %v694 = vadd.f32 %v682, %v686
    %v695 = vadd.f32 %v683, %v687
    %v696 = vadd.f32 %v684, %v688
    %v697 = vadd.f32 %v685, %v689
    %v702 = vrot.slane %v695, 7
    %vm703 = vcmask 1041409
    %v704 = vsel %vm703, %v702, %v694
    %v705 = vrot.slane %v696, 6
    %vm706 = vcmask 1042434
    %v707 = vsel %vm706, %v705, %v704
    %v708 = vrot.slane %v697, 5
    %vm709 = vcmask 1043459
    %v710 = vsel %vm709, %v708, %v707
    %vm712 = vcmask 35840
    %v713 = vsel %vm712, %v710, 0.0
    %714 = vadd.xlane.f32.xlu0 %v713
    %v715 = vpop.xlane.xlu0 %714
    %v716 = vrot.slane %v715, 4
    %v717 = vadd.f32 %v715, %v716
    %v718 = vrot.slane %v717, 2
    %v719 = vadd.f32 %v717, %v718
    %v720 = vrot.slane %v719, 1
    %v721 = vadd.f32 %v719, %v720
    %s722 = vtos %v721
    %v723 = vstv %s722
    %v724 = vadd.f32 %v560, %v723
    %vm725 = vcmask 36864
    %v726 = vsel %vm725, %v510, -inf
    %v727 = vrot.slane %v726, 4
    %v728 = vmax.f32 %v726, %v727
    %v729 = vrot.slane %v728, 2
    %v730 = vmax.f32 %v728, %v729
    %v731 = vrot.slane %v730, 1
    %v732 = vmax.f32 %v730, %v731
    %v733 = vsub.f32 %v510, %v732
    %v734 = vmul.f32 %v733, 1.442695
    %v735 = vpow.pop %v734
    %v740 = vrot.slane %v502, 7
    %v741 = vsel %vm703, %v740, %v499
    %v742 = vrot.slane %v505, 6
    %v743 = vsel %vm706, %v742, %v741
    %v744 = vrot.slane %v508, 5
    %v745 = vsel %vm709, %v744, %v743
    %v747 = vsel %vm712, %v745, -inf
    %748 = vmax.xlane.f32.xlu0 %v747
    %v749 = vpop.xlane.xlu0 %748
    %v751 = vrot.slane %v749, 1
    %v752 = vrot.slane %v749, 2
    %v753 = vrot.slane %v749, 3
    %v758 = vsub.f32 %v499, %v749
    %v759 = vsub.f32 %v502, %v751
    %v760 = vsub.f32 %v505, %v752
    %v761 = vsub.f32 %v508, %v753
    %v762 = vmul.f32 %v758, 1.442695
    %v763 = vpow.pop %v762
    %v764 = vmul.f32 %v759, 1.442695
    %v765 = vpow.pop %v764
    %v766 = vmul.f32 %v760, 1.442695
    %v767 = vpow.pop %v766
    %v768 = vmul.f32 %v761, 1.442695
    %v769 = vpow.pop %v768
    %771 = vset.pattern.permute.xlu0 0
    %772 = vperm.xlu0 %771, %v763
    %v773 = vpop.permute.xlu0 %772
    %776 = vset.pattern.permute.xlu0 0
    %777 = vperm.xlu0 %776, %v765
    %v778 = vpop.permute.xlu0 %777
    %781 = vset.pattern.permute.xlu0 0
    %782 = vperm.xlu0 %781, %v767
    %v783 = vpop.permute.xlu0 %782
    %786 = vset.pattern.permute.xlu0 0
    %787 = vperm.xlu0 %786, %v769
    %v788 = vpop.permute.xlu0 %787
    %v790 = vperm.slane %v735, 0
    %v791 = vmul.f32 %v773, %v790
    %v792 = vmul.f32 %v778, %v790
    %v793 = vmul.f32 %v783, %v790
    %v794 = vmul.f32 %v788, %v790
    %795 = vset.pattern.permute.xlu0 1
    %796 = vperm.xlu0 %795, %v763
    %v797 = vpop.permute.xlu0 %796
    %799 = vset.pattern.permute.xlu0 1
    %800 = vperm.xlu0 %799, %v765
    %v801 = vpop.permute.xlu0 %800
    %803 = vset.pattern.permute.xlu0 1
    %804 = vperm.xlu0 %803, %v767
    %v805 = vpop.permute.xlu0 %804
    %807 = vset.pattern.permute.xlu0 1
    %808 = vperm.xlu0 %807, %v769
    %v809 = vpop.permute.xlu0 %808
    %v811 = vperm.slane %v735, 1
    %v812 = vmul.f32 %v797, %v811
    %v813 = vmul.f32 %v801, %v811
    %v814 = vmul.f32 %v805, %v811
    %v815 = vmul.f32 %v809, %v811
    %v816 = vadd.f32 %v791, %v812
    %v817 = vadd.f32 %v792, %v813
    %v818 = vadd.f32 %v793, %v814
    %v819 = vadd.f32 %v794, %v815
    %820 = vset.pattern.permute.xlu0 2
    %821 = vperm.xlu0 %820, %v763
    %v822 = vpop.permute.xlu0 %821
    %824 = vset.pattern.permute.xlu0 2
    %825 = vperm.xlu0 %824, %v765
    %v826 = vpop.permute.xlu0 %825
    %828 = vset.pattern.permute.xlu0 2
    %829 = vperm.xlu0 %828, %v767
    %v830 = vpop.permute.xlu0 %829
    %832 = vset.pattern.permute.xlu0 2
    %833 = vperm.xlu0 %832, %v769
    %v834 = vpop.permute.xlu0 %833
    %v836 = vperm.slane %v735, 2
    %v837 = vmul.f32 %v822, %v836
    %v838 = vmul.f32 %v826, %v836
    %v839 = vmul.f32 %v830, %v836
    %v840 = vmul.f32 %v834, %v836
    %v841 = vadd.f32 %v816, %v837
    %v842 = vadd.f32 %v817, %v838
    %v843 = vadd.f32 %v818, %v839
    %v844 = vadd.f32 %v819, %v840
    %845 = vset.pattern.permute.xlu0 3
    %846 = vperm.xlu0 %845, %v763
    %v847 = vpop.permute.xlu0 %846
    %849 = vset.pattern.permute.xlu0 3
    %850 = vperm.xlu0 %849, %v765
    %v851 = vpop.permute.xlu0 %850
    %853 = vset.pattern.permute.xlu0 3
    %854 = vperm.xlu0 %853, %v767
    %v855 = vpop.permute.xlu0 %854
    %857 = vset.pattern.permute.xlu0 3
    %858 = vperm.xlu0 %857, %v769
    %v859 = vpop.permute.xlu0 %858
    %v861 = vperm.slane %v735, 3
    %v862 = vmul.f32 %v847, %v861
    %v863 = vmul.f32 %v851, %v861
    %v864 = vmul.f32 %v855, %v861
    %v865 = vmul.f32 %v859, %v861
    %v866 = vadd.f32 %v841, %v862
    %v867 = vadd.f32 %v842, %v863
    %v868 = vadd.f32 %v843, %v864
    %v869 = vadd.f32 %v844, %v865
    %870 = vset.pattern.permute.xlu0 4
    %871 = vperm.xlu0 %870, %v763
    %v872 = vpop.permute.xlu0 %871
    %874 = vset.pattern.permute.xlu0 4
    %875 = vperm.xlu0 %874, %v765
    %v876 = vpop.permute.xlu0 %875
    %878 = vset.pattern.permute.xlu0 4
    %879 = vperm.xlu0 %878, %v767
    %v880 = vpop.permute.xlu0 %879
    %882 = vset.pattern.permute.xlu0 4
    %883 = vperm.xlu0 %882, %v769
    %v884 = vpop.permute.xlu0 %883
    %v886 = vperm.slane %v735, 4
    %v887 = vmul.f32 %v872, %v886
    %v888 = vmul.f32 %v876, %v886
    %v889 = vmul.f32 %v880, %v886
    %v890 = vmul.f32 %v884, %v886
    %v891 = vadd.f32 %v866, %v887
    %v892 = vadd.f32 %v867, %v888
    %v893 = vadd.f32 %v868, %v889
    %v894 = vadd.f32 %v869, %v890
    %v895 = vlog2.pop %v891
    %v896 = vmul.f32 %v895, 0.6931472
    %v897 = vlog2.pop %v892
    %v898 = vmul.f32 %v897, 0.6931472
    %v899 = vlog2.pop %v893
    %v900 = vmul.f32 %v899, 0.6931472
    %v901 = vlog2.pop %v894
    %v902 = vmul.f32 %v901, 0.6931472
    %v903 = vadd.f32 %v896, %v749
    %v904 = vadd.f32 %v898, %v751
    %v905 = vadd.f32 %v900, %v752
    %v906 = vadd.f32 %v902, %v753
    %v907 = vadd.f32 %v903, %v732
    %v908 = vadd.f32 %v904, %v732
    %v909 = vadd.f32 %v905, %v732
    %v910 = vadd.f32 %v906, %v732
    %v911 = vrot.slane %v499, 1
    %v912 = vrot.slane %v502, 1
    %v913 = vrot.slane %v505, 1
    %v914 = vrot.slane %v508, 1
    %v919 = vadd.f32 %v907, %v911
    %v920 = vadd.f32 %v908, %v912
    %v921 = vadd.f32 %v909, %v913
    %v922 = vadd.f32 %v910, %v914
    %v927 = vrot.slane %v920, 7
    %v928 = vsel %vm703, %v927, %v919
    %v929 = vrot.slane %v921, 6
    %v930 = vsel %vm706, %v929, %v928
    %v931 = vrot.slane %v922, 5
    %v932 = vsel %vm709, %v931, %v930
    %v934 = vsel %vm712, %v932, -inf
    %935 = vmax.xlane.f32.xlu0 %v934
    %v936 = vpop.xlane.xlu0 %935
    %v938 = vrot.slane %v936, 1
    %v939 = vrot.slane %v936, 2
    %v940 = vrot.slane %v936, 3
    %v945 = vsub.f32 %v919, %v936
    %v946 = vsub.f32 %v920, %v938
    %v947 = vsub.f32 %v921, %v939
    %v948 = vsub.f32 %v922, %v940
    %v949 = vmul.f32 %v945, 1.442695
    %v950 = vpow.pop %v949
    %v951 = vmul.f32 %v946, 1.442695
    %v952 = vpow.pop %v951
    %v953 = vmul.f32 %v947, 1.442695
    %v954 = vpow.pop %v953
    %v955 = vmul.f32 %v948, 1.442695
    %v956 = vpow.pop %v955
    %958 = vset.pattern.permute.xlu0 0
    %959 = vperm.xlu0 %958, %v950
    %v960 = vpop.permute.xlu0 %959
    %963 = vset.pattern.permute.xlu0 0
    %964 = vperm.xlu0 %963, %v952
    %v965 = vpop.permute.xlu0 %964
    %968 = vset.pattern.permute.xlu0 0
    %969 = vperm.xlu0 %968, %v954
    %v970 = vpop.permute.xlu0 %969
    %973 = vset.pattern.permute.xlu0 0
    %974 = vperm.xlu0 %973, %v956
    %v975 = vpop.permute.xlu0 %974
    %v977 = vmul.f32 %v960, %v790
    %v978 = vmul.f32 %v965, %v790
    %v979 = vmul.f32 %v970, %v790
    %v980 = vmul.f32 %v975, %v790
    %981 = vset.pattern.permute.xlu0 1
    %982 = vperm.xlu0 %981, %v950
    %v983 = vpop.permute.xlu0 %982
    %985 = vset.pattern.permute.xlu0 1
    %986 = vperm.xlu0 %985, %v952
    %v987 = vpop.permute.xlu0 %986
    %989 = vset.pattern.permute.xlu0 1
    %990 = vperm.xlu0 %989, %v954
    %v991 = vpop.permute.xlu0 %990
    %993 = vset.pattern.permute.xlu0 1
    %994 = vperm.xlu0 %993, %v956
    %v995 = vpop.permute.xlu0 %994
    %v997 = vmul.f32 %v983, %v811
    %v998 = vmul.f32 %v987, %v811
    %v999 = vmul.f32 %v991, %v811
    %v1000 = vmul.f32 %v995, %v811
    %v1001 = vadd.f32 %v977, %v997
    %v1002 = vadd.f32 %v978, %v998
    %v1003 = vadd.f32 %v979, %v999
    %v1004 = vadd.f32 %v980, %v1000
    %1005 = vset.pattern.permute.xlu0 2
    %1006 = vperm.xlu0 %1005, %v950
    %v1007 = vpop.permute.xlu0 %1006
    %1009 = vset.pattern.permute.xlu0 2
    %1010 = vperm.xlu0 %1009, %v952
    %v1011 = vpop.permute.xlu0 %1010
    %1013 = vset.pattern.permute.xlu0 2
    %1014 = vperm.xlu0 %1013, %v954
    %v1015 = vpop.permute.xlu0 %1014
    %1017 = vset.pattern.permute.xlu0 2
    %1018 = vperm.xlu0 %1017, %v956
    %v1019 = vpop.permute.xlu0 %1018
    %v1021 = vmul.f32 %v1007, %v836
    %v1022 = vmul.f32 %v1011, %v836
    %v1023 = vmul.f32 %v1015, %v836
    %v1024 = vmul.f32 %v1019, %v836
    %v1025 = vadd.f32 %v1001, %v1021
    %v1026 = vadd.f32 %v1002, %v1022
    %v1027 = vadd.f32 %v1003, %v1023
    %v1028 = vadd.f32 %v1004, %v1024
    %1029 = vset.pattern.permute.xlu0 3
    %1030 = vperm.xlu0 %1029, %v950
    %v1031 = vpop.permute.xlu0 %1030
    %1033 = vset.pattern.permute.xlu0 3
    %1034 = vperm.xlu0 %1033, %v952
    %v1035 = vpop.permute.xlu0 %1034
    %1037 = vset.pattern.permute.xlu0 3
    %1038 = vperm.xlu0 %1037, %v954
    %v1039 = vpop.permute.xlu0 %1038
    %1041 = vset.pattern.permute.xlu0 3
    %1042 = vperm.xlu0 %1041, %v956
    %v1043 = vpop.permute.xlu0 %1042
    %v1045 = vmul.f32 %v1031, %v861
    %v1046 = vmul.f32 %v1035, %v861
    %v1047 = vmul.f32 %v1039, %v861
    %v1048 = vmul.f32 %v1043, %v861
    %v1049 = vadd.f32 %v1025, %v1045
    %v1050 = vadd.f32 %v1026, %v1046
    %v1051 = vadd.f32 %v1027, %v1047
    %v1052 = vadd.f32 %v1028, %v1048
    %1053 = vset.pattern.permute.xlu0 4
    %1054 = vperm.xlu0 %1053, %v950
    %v1055 = vpop.permute.xlu0 %1054
    %1057 = vset.pattern.permute.xlu0 4
    %1058 = vperm.xlu0 %1057, %v952
    %v1059 = vpop.permute.xlu0 %1058
    %1061 = vset.pattern.permute.xlu0 4
    %1062 = vperm.xlu0 %1061, %v954
    %v1063 = vpop.permute.xlu0 %1062
    %1065 = vset.pattern.permute.xlu0 4
    %1066 = vperm.xlu0 %1065, %v956
    %v1067 = vpop.permute.xlu0 %1066
    %v1069 = vmul.f32 %v1055, %v886
    %v1070 = vmul.f32 %v1059, %v886
    %v1071 = vmul.f32 %v1063, %v886
    %v1072 = vmul.f32 %v1067, %v886
    %v1073 = vadd.f32 %v1049, %v1069
    %v1074 = vadd.f32 %v1050, %v1070
    %v1075 = vadd.f32 %v1051, %v1071
    %v1076 = vadd.f32 %v1052, %v1072
    %v1077 = vlog2.pop %v1073
    %v1078 = vmul.f32 %v1077, 0.6931472
    %v1079 = vlog2.pop %v1074
    %v1080 = vmul.f32 %v1079, 0.6931472
    %v1081 = vlog2.pop %v1075
    %v1082 = vmul.f32 %v1081, 0.6931472
    %v1083 = vlog2.pop %v1076
    %v1084 = vmul.f32 %v1083, 0.6931472
    %v1085 = vadd.f32 %v1078, %v936
    %v1086 = vadd.f32 %v1080, %v938
    %v1087 = vadd.f32 %v1082, %v939
    %v1088 = vadd.f32 %v1084, %v940
    %v1089 = vadd.f32 %v1085, %v732
    %v1090 = vadd.f32 %v1086, %v732
    %v1091 = vadd.f32 %v1087, %v732
    %v1092 = vadd.f32 %v1088, %v732
    %v1093 = vrot.slane %v499, 2
    %v1094 = vrot.slane %v502, 2
    %v1095 = vrot.slane %v505, 2
    %v1096 = vrot.slane %v508, 2
    %v1101 = vadd.f32 %v1089, %v1093
    %v1102 = vadd.f32 %v1090, %v1094
    %v1103 = vadd.f32 %v1091, %v1095
    %v1104 = vadd.f32 %v1092, %v1096
    %v1109 = vrot.slane %v1102, 7
    %v1110 = vsel %vm703, %v1109, %v1101
    %v1111 = vrot.slane %v1103, 6
    %v1112 = vsel %vm706, %v1111, %v1110
    %v1113 = vrot.slane %v1104, 5
    %v1114 = vsel %vm709, %v1113, %v1112
    %v1116 = vsel %vm712, %v1114, -inf
    %1117 = vmax.xlane.f32.xlu0 %v1116
    %v1118 = vpop.xlane.xlu0 %1117
    %v1120 = vrot.slane %v1118, 1
    %v1121 = vrot.slane %v1118, 2
    %v1122 = vrot.slane %v1118, 3
    %v1127 = vsub.f32 %v1101, %v1118
    %v1128 = vsub.f32 %v1102, %v1120
    %v1129 = vsub.f32 %v1103, %v1121
    %v1130 = vsub.f32 %v1104, %v1122
    %v1131 = vmul.f32 %v1127, 1.442695
    %v1132 = vpow.pop %v1131
    %v1133 = vmul.f32 %v1128, 1.442695
    %v1134 = vpow.pop %v1133
    %v1135 = vmul.f32 %v1129, 1.442695
    %v1136 = vpow.pop %v1135
    %v1137 = vmul.f32 %v1130, 1.442695
    %v1138 = vpow.pop %v1137
    %1140 = vset.pattern.permute.xlu0 0
    %1141 = vperm.xlu0 %1140, %v1132
    %v1142 = vpop.permute.xlu0 %1141
    %1145 = vset.pattern.permute.xlu0 0
    %1146 = vperm.xlu0 %1145, %v1134
    %v1147 = vpop.permute.xlu0 %1146
    %1150 = vset.pattern.permute.xlu0 0
    %1151 = vperm.xlu0 %1150, %v1136
    %v1152 = vpop.permute.xlu0 %1151
    %1155 = vset.pattern.permute.xlu0 0
    %1156 = vperm.xlu0 %1155, %v1138
    %v1157 = vpop.permute.xlu0 %1156
    %v1159 = vmul.f32 %v1142, %v790
    %v1160 = vmul.f32 %v1147, %v790
    %v1161 = vmul.f32 %v1152, %v790
    %v1162 = vmul.f32 %v1157, %v790
    %1163 = vset.pattern.permute.xlu0 1
    %1164 = vperm.xlu0 %1163, %v1132
    %v1165 = vpop.permute.xlu0 %1164
    %1167 = vset.pattern.permute.xlu0 1
    %1168 = vperm.xlu0 %1167, %v1134
    %v1169 = vpop.permute.xlu0 %1168
    %1171 = vset.pattern.permute.xlu0 1
    %1172 = vperm.xlu0 %1171, %v1136
    %v1173 = vpop.permute.xlu0 %1172
    %1175 = vset.pattern.permute.xlu0 1
    %1176 = vperm.xlu0 %1175, %v1138
    %v1177 = vpop.permute.xlu0 %1176
    %v1179 = vmul.f32 %v1165, %v811
    %v1180 = vmul.f32 %v1169, %v811
    %v1181 = vmul.f32 %v1173, %v811
    %v1182 = vmul.f32 %v1177, %v811
    %v1183 = vadd.f32 %v1159, %v1179
    %v1184 = vadd.f32 %v1160, %v1180
    %v1185 = vadd.f32 %v1161, %v1181
    %v1186 = vadd.f32 %v1162, %v1182
    %1187 = vset.pattern.permute.xlu0 2
    %1188 = vperm.xlu0 %1187, %v1132
    %v1189 = vpop.permute.xlu0 %1188
    %1191 = vset.pattern.permute.xlu0 2
    %1192 = vperm.xlu0 %1191, %v1134
    %v1193 = vpop.permute.xlu0 %1192
    %1195 = vset.pattern.permute.xlu0 2
    %1196 = vperm.xlu0 %1195, %v1136
    %v1197 = vpop.permute.xlu0 %1196
    %1199 = vset.pattern.permute.xlu0 2
    %1200 = vperm.xlu0 %1199, %v1138
    %v1201 = vpop.permute.xlu0 %1200
    %v1203 = vmul.f32 %v1189, %v836
    %v1204 = vmul.f32 %v1193, %v836
    %v1205 = vmul.f32 %v1197, %v836
    %v1206 = vmul.f32 %v1201, %v836
    %v1207 = vadd.f32 %v1183, %v1203
    %v1208 = vadd.f32 %v1184, %v1204
    %v1209 = vadd.f32 %v1185, %v1205
    %v1210 = vadd.f32 %v1186, %v1206
    %1211 = vset.pattern.permute.xlu0 3
    %1212 = vperm.xlu0 %1211, %v1132
    %v1213 = vpop.permute.xlu0 %1212
    %1215 = vset.pattern.permute.xlu0 3
    %1216 = vperm.xlu0 %1215, %v1134
    %v1217 = vpop.permute.xlu0 %1216
    %1219 = vset.pattern.permute.xlu0 3
    %1220 = vperm.xlu0 %1219, %v1136
    %v1221 = vpop.permute.xlu0 %1220
    %1223 = vset.pattern.permute.xlu0 3
    %1224 = vperm.xlu0 %1223, %v1138
    %v1225 = vpop.permute.xlu0 %1224
    %v1227 = vmul.f32 %v1213, %v861
    %v1228 = vmul.f32 %v1217, %v861
    %v1229 = vmul.f32 %v1221, %v861
    %v1230 = vmul.f32 %v1225, %v861
    %v1231 = vadd.f32 %v1207, %v1227
    %v1232 = vadd.f32 %v1208, %v1228
    %v1233 = vadd.f32 %v1209, %v1229
    %v1234 = vadd.f32 %v1210, %v1230
    %1235 = vset.pattern.permute.xlu0 4
    %1236 = vperm.xlu0 %1235, %v1132
    %v1237 = vpop.permute.xlu0 %1236
    %1239 = vset.pattern.permute.xlu0 4
    %1240 = vperm.xlu0 %1239, %v1134
    %v1241 = vpop.permute.xlu0 %1240
    %1243 = vset.pattern.permute.xlu0 4
    %1244 = vperm.xlu0 %1243, %v1136
    %v1245 = vpop.permute.xlu0 %1244
    %1247 = vset.pattern.permute.xlu0 4
    %1248 = vperm.xlu0 %1247, %v1138
    %v1249 = vpop.permute.xlu0 %1248
    %v1251 = vmul.f32 %v1237, %v886
    %v1252 = vmul.f32 %v1241, %v886
    %v1253 = vmul.f32 %v1245, %v886
    %v1254 = vmul.f32 %v1249, %v886
    %v1255 = vadd.f32 %v1231, %v1251
    %v1256 = vadd.f32 %v1232, %v1252
    %v1257 = vadd.f32 %v1233, %v1253
    %v1258 = vadd.f32 %v1234, %v1254
    %v1259 = vlog2.pop %v1255
    %v1260 = vmul.f32 %v1259, 0.6931472
    %v1261 = vlog2.pop %v1256
    %v1262 = vmul.f32 %v1261, 0.6931472
    %v1263 = vlog2.pop %v1257
    %v1264 = vmul.f32 %v1263, 0.6931472
    %v1265 = vlog2.pop %v1258
    %v1266 = vmul.f32 %v1265, 0.6931472
    %v1267 = vadd.f32 %v1260, %v1118
    %v1268 = vadd.f32 %v1262, %v1120
    %v1269 = vadd.f32 %v1264, %v1121
    %v1270 = vadd.f32 %v1266, %v1122
    %v1271 = vadd.f32 %v1267, %v732
    %v1272 = vadd.f32 %v1268, %v732
    %v1273 = vadd.f32 %v1269, %v732
    %v1274 = vadd.f32 %v1270, %v732
    %v1275 = vrot.slane %v499, 3
    %v1276 = vrot.slane %v502, 3
    %v1277 = vrot.slane %v505, 3
    %v1278 = vrot.slane %v508, 3
    %v1283 = vadd.f32 %v1271, %v1275
    %v1284 = vadd.f32 %v1272, %v1276
    %v1285 = vadd.f32 %v1273, %v1277
    %v1286 = vadd.f32 %v1274, %v1278
    %v1291 = vrot.slane %v1284, 7
    %v1292 = vsel %vm703, %v1291, %v1283
    %v1293 = vrot.slane %v1285, 6
    %v1294 = vsel %vm706, %v1293, %v1292
    %v1295 = vrot.slane %v1286, 5
    %v1296 = vsel %vm709, %v1295, %v1294
    %v1298 = vsel %vm712, %v1296, -inf
    %1299 = vmax.xlane.f32.xlu0 %v1298
    %v1300 = vpop.xlane.xlu0 %1299
    %v1302 = vrot.slane %v1300, 1
    %v1303 = vrot.slane %v1300, 2
    %v1304 = vrot.slane %v1300, 3
    %v1309 = vsub.f32 %v1283, %v1300
    %v1310 = vsub.f32 %v1284, %v1302
    %v1311 = vsub.f32 %v1285, %v1303
    %v1312 = vsub.f32 %v1286, %v1304
    %v1313 = vmul.f32 %v1309, 1.442695
    %v1314 = vpow.pop %v1313
    %v1315 = vmul.f32 %v1310, 1.442695
    %v1316 = vpow.pop %v1315
    %v1317 = vmul.f32 %v1311, 1.442695
    %v1318 = vpow.pop %v1317
    %v1319 = vmul.f32 %v1312, 1.442695
    %v1320 = vpow.pop %v1319
    %1322 = vset.pattern.permute.xlu0 0
    %1323 = vperm.xlu0 %1322, %v1314
    %v1324 = vpop.permute.xlu0 %1323
    %1327 = vset.pattern.permute.xlu0 0
    %1328 = vperm.xlu0 %1327, %v1316
    %v1329 = vpop.permute.xlu0 %1328
    %1332 = vset.pattern.permute.xlu0 0
    %1333 = vperm.xlu0 %1332, %v1318
    %v1334 = vpop.permute.xlu0 %1333
    %1337 = vset.pattern.permute.xlu0 0
    %1338 = vperm.xlu0 %1337, %v1320
    %v1339 = vpop.permute.xlu0 %1338
    %v1341 = vmul.f32 %v1324, %v790
    %v1342 = vmul.f32 %v1329, %v790
    %v1343 = vmul.f32 %v1334, %v790
    %v1344 = vmul.f32 %v1339, %v790
    %1345 = vset.pattern.permute.xlu0 1
    %1346 = vperm.xlu0 %1345, %v1314
    %v1347 = vpop.permute.xlu0 %1346
    %1349 = vset.pattern.permute.xlu0 1
    %1350 = vperm.xlu0 %1349, %v1316
    %v1351 = vpop.permute.xlu0 %1350
    %1353 = vset.pattern.permute.xlu0 1
    %1354 = vperm.xlu0 %1353, %v1318
    %v1355 = vpop.permute.xlu0 %1354
    %1357 = vset.pattern.permute.xlu0 1
    %1358 = vperm.xlu0 %1357, %v1320
    %v1359 = vpop.permute.xlu0 %1358
    %v1361 = vmul.f32 %v1347, %v811
    %v1362 = vmul.f32 %v1351, %v811
    %v1363 = vmul.f32 %v1355, %v811
    %v1364 = vmul.f32 %v1359, %v811
    %v1365 = vadd.f32 %v1341, %v1361
    %v1366 = vadd.f32 %v1342, %v1362
    %v1367 = vadd.f32 %v1343, %v1363
    %v1368 = vadd.f32 %v1344, %v1364
    %1369 = vset.pattern.permute.xlu0 2
    %1370 = vperm.xlu0 %1369, %v1314
    %v1371 = vpop.permute.xlu0 %1370
    %1373 = vset.pattern.permute.xlu0 2
    %1374 = vperm.xlu0 %1373, %v1316
    %v1375 = vpop.permute.xlu0 %1374
    %1377 = vset.pattern.permute.xlu0 2
    %1378 = vperm.xlu0 %1377, %v1318
    %v1379 = vpop.permute.xlu0 %1378
    %1381 = vset.pattern.permute.xlu0 2
    %1382 = vperm.xlu0 %1381, %v1320
    %v1383 = vpop.permute.xlu0 %1382
    %v1385 = vmul.f32 %v1371, %v836
    %v1386 = vmul.f32 %v1375, %v836
    %v1387 = vmul.f32 %v1379, %v836
    %v1388 = vmul.f32 %v1383, %v836
    %v1389 = vadd.f32 %v1365, %v1385
    %v1390 = vadd.f32 %v1366, %v1386
    %v1391 = vadd.f32 %v1367, %v1387
    %v1392 = vadd.f32 %v1368, %v1388
    %1393 = vset.pattern.permute.xlu0 3
    %1394 = vperm.xlu0 %1393, %v1314
    %v1395 = vpop.permute.xlu0 %1394
    %1397 = vset.pattern.permute.xlu0 3
    %1398 = vperm.xlu0 %1397, %v1316
    %v1399 = vpop.permute.xlu0 %1398
    %1401 = vset.pattern.permute.xlu0 3
    %1402 = vperm.xlu0 %1401, %v1318
    %v1403 = vpop.permute.xlu0 %1402
    %1405 = vset.pattern.permute.xlu0 3
    %1406 = vperm.xlu0 %1405, %v1320
    %v1407 = vpop.permute.xlu0 %1406
    %v1409 = vmul.f32 %v1395, %v861
    %v1410 = vmul.f32 %v1399, %v861
    %v1411 = vmul.f32 %v1403, %v861
    %v1412 = vmul.f32 %v1407, %v861
    %v1413 = vadd.f32 %v1389, %v1409
    %v1414 = vadd.f32 %v1390, %v1410
    %v1415 = vadd.f32 %v1391, %v1411
    %v1416 = vadd.f32 %v1392, %v1412
    %1417 = vset.pattern.permute.xlu0 4
    %1418 = vperm.xlu0 %1417, %v1314
    %v1419 = vpop.permute.xlu0 %1418
    %1421 = vset.pattern.permute.xlu0 4
    %1422 = vperm.xlu0 %1421, %v1316
    %v1423 = vpop.permute.xlu0 %1422
    %1425 = vset.pattern.permute.xlu0 4
    %1426 = vperm.xlu0 %1425, %v1318
    %v1427 = vpop.permute.xlu0 %1426
    %1429 = vset.pattern.permute.xlu0 4
    %1430 = vperm.xlu0 %1429, %v1320
    %v1431 = vpop.permute.xlu0 %1430
    %v1433 = vmul.f32 %v1419, %v886
    %v1434 = vmul.f32 %v1423, %v886
    %v1435 = vmul.f32 %v1427, %v886
    %v1436 = vmul.f32 %v1431, %v886
    %v1437 = vadd.f32 %v1413, %v1433
    %v1438 = vadd.f32 %v1414, %v1434
    %v1439 = vadd.f32 %v1415, %v1435
    %v1440 = vadd.f32 %v1416, %v1436
    %v1441 = vlog2.pop %v1437
    %v1442 = vmul.f32 %v1441, 0.6931472
    %v1443 = vlog2.pop %v1438
    %v1444 = vmul.f32 %v1443, 0.6931472
    %v1445 = vlog2.pop %v1439
    %v1446 = vmul.f32 %v1445, 0.6931472
    %v1447 = vlog2.pop %v1440
    %v1448 = vmul.f32 %v1447, 0.6931472
    %v1449 = vadd.f32 %v1442, %v1300
    %v1450 = vadd.f32 %v1444, %v1302
    %v1451 = vadd.f32 %v1446, %v1303
    %v1452 = vadd.f32 %v1448, %v1304
    %v1453 = vadd.f32 %v1449, %v732
    %v1454 = vadd.f32 %v1450, %v732
    %v1455 = vadd.f32 %v1451, %v732
    %v1456 = vadd.f32 %v1452, %v732
    %v1457 = vrot.slane %v499, 4
    %v1458 = vrot.slane %v502, 4
    %v1459 = vrot.slane %v505, 4
    %v1460 = vrot.slane %v508, 4
    %v1465 = vadd.f32 %v1453, %v1457
    %v1466 = vadd.f32 %v1454, %v1458
    %v1467 = vadd.f32 %v1455, %v1459
    %v1468 = vadd.f32 %v1456, %v1460
    %v1473 = vrot.slane %v1466, 7
    %v1474 = vsel %vm703, %v1473, %v1465
    %v1475 = vrot.slane %v1467, 6
    %v1476 = vsel %vm706, %v1475, %v1474
    %v1477 = vrot.slane %v1468, 5
    %v1478 = vsel %vm709, %v1477, %v1476
    %v1480 = vsel %vm712, %v1478, -inf
    %1481 = vmax.xlane.f32.xlu0 %v1480
    %v1482 = vpop.xlane.xlu0 %1481
    %v1484 = vrot.slane %v1482, 1
    %v1485 = vrot.slane %v1482, 2
    %v1486 = vrot.slane %v1482, 3
    %v1491 = vsub.f32 %v1465, %v1482
    %v1492 = vsub.f32 %v1466, %v1484
    %v1493 = vsub.f32 %v1467, %v1485
    %v1494 = vsub.f32 %v1468, %v1486
    %v1495 = vmul.f32 %v1491, 1.442695
    %v1496 = vpow.pop %v1495
    %v1497 = vmul.f32 %v1492, 1.442695
    %v1498 = vpow.pop %v1497
    %v1499 = vmul.f32 %v1493, 1.442695
    %v1500 = vpow.pop %v1499
    %v1501 = vmul.f32 %v1494, 1.442695
    %v1502 = vpow.pop %v1501
    %1504 = vset.pattern.permute.xlu0 0
    %1505 = vperm.xlu0 %1504, %v1496
    %v1506 = vpop.permute.xlu0 %1505
    %1509 = vset.pattern.permute.xlu0 0
    %1510 = vperm.xlu0 %1509, %v1498
    %v1511 = vpop.permute.xlu0 %1510
    %1514 = vset.pattern.permute.xlu0 0
    %1515 = vperm.xlu0 %1514, %v1500
    %v1516 = vpop.permute.xlu0 %1515
    %1519 = vset.pattern.permute.xlu0 0
    %1520 = vperm.xlu0 %1519, %v1502
    %v1521 = vpop.permute.xlu0 %1520
    %v1523 = vmul.f32 %v1506, %v790
    %v1524 = vmul.f32 %v1511, %v790
    %v1525 = vmul.f32 %v1516, %v790
    %v1526 = vmul.f32 %v1521, %v790
    %1527 = vset.pattern.permute.xlu0 1
    %1528 = vperm.xlu0 %1527, %v1496
    %v1529 = vpop.permute.xlu0 %1528
    %1531 = vset.pattern.permute.xlu0 1
    %1532 = vperm.xlu0 %1531, %v1498
    %v1533 = vpop.permute.xlu0 %1532
    %1535 = vset.pattern.permute.xlu0 1
    %1536 = vperm.xlu0 %1535, %v1500
    %v1537 = vpop.permute.xlu0 %1536
    %1539 = vset.pattern.permute.xlu0 1
    %1540 = vperm.xlu0 %1539, %v1502
    %v1541 = vpop.permute.xlu0 %1540
    %v1543 = vmul.f32 %v1529, %v811
    %v1544 = vmul.f32 %v1533, %v811
    %v1545 = vmul.f32 %v1537, %v811
    %v1546 = vmul.f32 %v1541, %v811
    %v1547 = vadd.f32 %v1523, %v1543
    %v1548 = vadd.f32 %v1524, %v1544
    %v1549 = vadd.f32 %v1525, %v1545
    %v1550 = vadd.f32 %v1526, %v1546
    %1551 = vset.pattern.permute.xlu0 2
    %1552 = vperm.xlu0 %1551, %v1496
    %v1553 = vpop.permute.xlu0 %1552
    %1555 = vset.pattern.permute.xlu0 2
    %1556 = vperm.xlu0 %1555, %v1498
    %v1557 = vpop.permute.xlu0 %1556
    %1559 = vset.pattern.permute.xlu0 2
    %1560 = vperm.xlu0 %1559, %v1500
    %v1561 = vpop.permute.xlu0 %1560
    %1563 = vset.pattern.permute.xlu0 2
    %1564 = vperm.xlu0 %1563, %v1502
    %v1565 = vpop.permute.xlu0 %1564
    %v1567 = vmul.f32 %v1553, %v836
    %v1568 = vmul.f32 %v1557, %v836
    %v1569 = vmul.f32 %v1561, %v836
    %v1570 = vmul.f32 %v1565, %v836
    %v1571 = vadd.f32 %v1547, %v1567
    %v1572 = vadd.f32 %v1548, %v1568
    %v1573 = vadd.f32 %v1549, %v1569
    %v1574 = vadd.f32 %v1550, %v1570
    %1575 = vset.pattern.permute.xlu0 3
    %1576 = vperm.xlu0 %1575, %v1496
    %v1577 = vpop.permute.xlu0 %1576
    %1579 = vset.pattern.permute.xlu0 3
    %1580 = vperm.xlu0 %1579, %v1498
    %v1581 = vpop.permute.xlu0 %1580
    %1583 = vset.pattern.permute.xlu0 3
    %1584 = vperm.xlu0 %1583, %v1500
    %v1585 = vpop.permute.xlu0 %1584
    %1587 = vset.pattern.permute.xlu0 3
    %1588 = vperm.xlu0 %1587, %v1502
    %v1589 = vpop.permute.xlu0 %1588
    %v1591 = vmul.f32 %v1577, %v861
    %v1592 = vmul.f32 %v1581, %v861
    %v1593 = vmul.f32 %v1585, %v861
    %v1594 = vmul.f32 %v1589, %v861
    %v1595 = vadd.f32 %v1571, %v1591
    %v1596 = vadd.f32 %v1572, %v1592
    %v1597 = vadd.f32 %v1573, %v1593
    %v1598 = vadd.f32 %v1574, %v1594
    %1599 = vset.pattern.permute.xlu0 4
    %1600 = vperm.xlu0 %1599, %v1496
    %v1601 = vpop.permute.xlu0 %1600
    %1603 = vset.pattern.permute.xlu0 4
    %1604 = vperm.xlu0 %1603, %v1498
    %v1605 = vpop.permute.xlu0 %1604
    %1607 = vset.pattern.permute.xlu0 4
    %1608 = vperm.xlu0 %1607, %v1500
    %v1609 = vpop.permute.xlu0 %1608
    %1611 = vset.pattern.permute.xlu0 4
    %1612 = vperm.xlu0 %1611, %v1502
    %v1613 = vpop.permute.xlu0 %1612
    %v1615 = vmul.f32 %v1601, %v886
    %v1616 = vmul.f32 %v1605, %v886
    %v1617 = vmul.f32 %v1609, %v886
    %v1618 = vmul.f32 %v1613, %v886
    %v1619 = vadd.f32 %v1595, %v1615
    %v1620 = vadd.f32 %v1596, %v1616
    %v1621 = vadd.f32 %v1597, %v1617
    %v1622 = vadd.f32 %v1598, %v1618
    %v1623 = vlog2.pop %v1619
    %v1624 = vmul.f32 %v1623, 0.6931472
    %v1625 = vlog2.pop %v1620
    %v1626 = vmul.f32 %v1625, 0.6931472
    %v1627 = vlog2.pop %v1621
    %v1628 = vmul.f32 %v1627, 0.6931472
    %v1629 = vlog2.pop %v1622
    %v1630 = vmul.f32 %v1629, 0.6931472
    %v1631 = vadd.f32 %v1624, %v1482
    %v1632 = vadd.f32 %v1626, %v1484
    %v1633 = vadd.f32 %v1628, %v1485
    %v1634 = vadd.f32 %v1630, %v1486
    %v1635 = vadd.f32 %v1631, %v732
    %v1636 = vadd.f32 %v1632, %v732
    %v1637 = vadd.f32 %v1633, %v732
    %v1638 = vadd.f32 %v1634, %v732
    %v1639 = vrot.slane %v499, 5
    %v1640 = vrot.slane %v502, 5
    %v1641 = vrot.slane %v505, 5
    %v1646 = vadd.f32 %v1635, %v1639
    %v1647 = vadd.f32 %v1636, %v1640
    %v1648 = vadd.f32 %v1637, %v1641
    %v1649 = vadd.f32 %v1638, %v744
    %v1654 = vrot.slane %v1647, 7
    %v1655 = vsel %vm703, %v1654, %v1646
    %v1656 = vrot.slane %v1648, 6
    %v1657 = vsel %vm706, %v1656, %v1655
    %v1658 = vrot.slane %v1649, 5
    %v1659 = vsel %vm709, %v1658, %v1657
    %v1661 = vsel %vm712, %v1659, -inf
    %1662 = vmax.xlane.f32.xlu0 %v1661
    %v1663 = vpop.xlane.xlu0 %1662
    %v1665 = vrot.slane %v1663, 1
    %v1666 = vrot.slane %v1663, 2
    %v1667 = vrot.slane %v1663, 3
    %v1672 = vsub.f32 %v1646, %v1663
    %v1673 = vsub.f32 %v1647, %v1665
    %v1674 = vsub.f32 %v1648, %v1666
    %v1675 = vsub.f32 %v1649, %v1667
    %v1676 = vmul.f32 %v1672, 1.442695
    %v1677 = vpow.pop %v1676
    %v1678 = vmul.f32 %v1673, 1.442695
    %v1679 = vpow.pop %v1678
    %v1680 = vmul.f32 %v1674, 1.442695
    %v1681 = vpow.pop %v1680
    %v1682 = vmul.f32 %v1675, 1.442695
    %v1683 = vpow.pop %v1682
    %1685 = vset.pattern.permute.xlu0 0
    %1686 = vperm.xlu0 %1685, %v1677
    %v1687 = vpop.permute.xlu0 %1686
    %1690 = vset.pattern.permute.xlu0 0
    %1691 = vperm.xlu0 %1690, %v1679
    %v1692 = vpop.permute.xlu0 %1691
    %1695 = vset.pattern.permute.xlu0 0
    %1696 = vperm.xlu0 %1695, %v1681
    %v1697 = vpop.permute.xlu0 %1696
    %1700 = vset.pattern.permute.xlu0 0
    %1701 = vperm.xlu0 %1700, %v1683
    %v1702 = vpop.permute.xlu0 %1701
    %v1704 = vmul.f32 %v1687, %v790
    %v1705 = vmul.f32 %v1692, %v790
    %v1706 = vmul.f32 %v1697, %v790
    %v1707 = vmul.f32 %v1702, %v790
    %1708 = vset.pattern.permute.xlu0 1
    %1709 = vperm.xlu0 %1708, %v1677
    %v1710 = vpop.permute.xlu0 %1709
    %1712 = vset.pattern.permute.xlu0 1
    %1713 = vperm.xlu0 %1712, %v1679
    %v1714 = vpop.permute.xlu0 %1713
    %1716 = vset.pattern.permute.xlu0 1
    %1717 = vperm.xlu0 %1716, %v1681
    %v1718 = vpop.permute.xlu0 %1717
    %1720 = vset.pattern.permute.xlu0 1
    %1721 = vperm.xlu0 %1720, %v1683
    %v1722 = vpop.permute.xlu0 %1721
    %v1724 = vmul.f32 %v1710, %v811
    %v1725 = vmul.f32 %v1714, %v811
    %v1726 = vmul.f32 %v1718, %v811
    %v1727 = vmul.f32 %v1722, %v811
    %v1728 = vadd.f32 %v1704, %v1724
    %v1729 = vadd.f32 %v1705, %v1725
    %v1730 = vadd.f32 %v1706, %v1726
    %v1731 = vadd.f32 %v1707, %v1727
    %1732 = vset.pattern.permute.xlu0 2
    %1733 = vperm.xlu0 %1732, %v1677
    %v1734 = vpop.permute.xlu0 %1733
    %1736 = vset.pattern.permute.xlu0 2
    %1737 = vperm.xlu0 %1736, %v1679
    %v1738 = vpop.permute.xlu0 %1737
    %1740 = vset.pattern.permute.xlu0 2
    %1741 = vperm.xlu0 %1740, %v1681
    %v1742 = vpop.permute.xlu0 %1741
    %1744 = vset.pattern.permute.xlu0 2
    %1745 = vperm.xlu0 %1744, %v1683
    %v1746 = vpop.permute.xlu0 %1745
    %v1748 = vmul.f32 %v1734, %v836
    %v1749 = vmul.f32 %v1738, %v836
    %v1750 = vmul.f32 %v1742, %v836
    %v1751 = vmul.f32 %v1746, %v836
    %v1752 = vadd.f32 %v1728, %v1748
    %v1753 = vadd.f32 %v1729, %v1749
    %v1754 = vadd.f32 %v1730, %v1750
    %v1755 = vadd.f32 %v1731, %v1751
    %1756 = vset.pattern.permute.xlu0 3
    %1757 = vperm.xlu0 %1756, %v1677
    %v1758 = vpop.permute.xlu0 %1757
    %1760 = vset.pattern.permute.xlu0 3
    %1761 = vperm.xlu0 %1760, %v1679
    %v1762 = vpop.permute.xlu0 %1761
    %1764 = vset.pattern.permute.xlu0 3
    %1765 = vperm.xlu0 %1764, %v1681
    %v1766 = vpop.permute.xlu0 %1765
    %1768 = vset.pattern.permute.xlu0 3
    %1769 = vperm.xlu0 %1768, %v1683
    %v1770 = vpop.permute.xlu0 %1769
    %v1772 = vmul.f32 %v1758, %v861
    %v1773 = vmul.f32 %v1762, %v861
    %v1774 = vmul.f32 %v1766, %v861
    %v1775 = vmul.f32 %v1770, %v861
    %v1776 = vadd.f32 %v1752, %v1772
    %v1777 = vadd.f32 %v1753, %v1773
    %v1778 = vadd.f32 %v1754, %v1774
    %v1779 = vadd.f32 %v1755, %v1775
    %1780 = vset.pattern.permute.xlu0 4
    %1781 = vperm.xlu0 %1780, %v1677
    %v1782 = vpop.permute.xlu0 %1781
    %1784 = vset.pattern.permute.xlu0 4
    %1785 = vperm.xlu0 %1784, %v1679
    %v1786 = vpop.permute.xlu0 %1785
    %1788 = vset.pattern.permute.xlu0 4
    %1789 = vperm.xlu0 %1788, %v1681
    %v1790 = vpop.permute.xlu0 %1789
    %1792 = vset.pattern.permute.xlu0 4
    %1793 = vperm.xlu0 %1792, %v1683
    %v1794 = vpop.permute.xlu0 %1793
    %v1796 = vmul.f32 %v1782, %v886
    %v1797 = vmul.f32 %v1786, %v886
    %v1798 = vmul.f32 %v1790, %v886
    %v1799 = vmul.f32 %v1794, %v886
    %v1800 = vadd.f32 %v1776, %v1796
    %v1801 = vadd.f32 %v1777, %v1797
    %v1802 = vadd.f32 %v1778, %v1798
    %v1803 = vadd.f32 %v1779, %v1799
    %v1804 = vlog2.pop %v1800
    %v1805 = vmul.f32 %v1804, 0.6931472
    %v1806 = vlog2.pop %v1801
    %v1807 = vmul.f32 %v1806, 0.6931472
    %v1808 = vlog2.pop %v1802
    %v1809 = vmul.f32 %v1808, 0.6931472
    %v1810 = vlog2.pop %v1803
    %v1811 = vmul.f32 %v1810, 0.6931472
    %v1812 = vadd.f32 %v1805, %v1663
    %v1813 = vadd.f32 %v1807, %v1665
    %v1814 = vadd.f32 %v1809, %v1666
    %v1815 = vadd.f32 %v1811, %v1667
    %v1816 = vadd.f32 %v1812, %v732
    %v1817 = vadd.f32 %v1813, %v732
    %v1818 = vadd.f32 %v1814, %v732
    %v1819 = vadd.f32 %v1815, %v732
    %v1820 = vrot.slane %v499, 6
    %v1821 = vrot.slane %v502, 6
    %v1822 = vrot.slane %v508, 6
    %v1827 = vadd.f32 %v1816, %v1820
    %v1828 = vadd.f32 %v1817, %v1821
    %v1829 = vadd.f32 %v1818, %v742
    %v1830 = vadd.f32 %v1819, %v1822
    %v1835 = vrot.slane %v1828, 7
    %v1836 = vsel %vm703, %v1835, %v1827
    %v1837 = vrot.slane %v1829, 6
    %v1838 = vsel %vm706, %v1837, %v1836
    %v1839 = vrot.slane %v1830, 5
    %v1840 = vsel %vm709, %v1839, %v1838
    %v1842 = vsel %vm712, %v1840, -inf
    %1843 = vmax.xlane.f32.xlu0 %v1842
    %v1844 = vpop.xlane.xlu0 %1843
    %v1846 = vrot.slane %v1844, 1
    %v1847 = vrot.slane %v1844, 2
    %v1848 = vrot.slane %v1844, 3
    %v1853 = vsub.f32 %v1827, %v1844
    %v1854 = vsub.f32 %v1828, %v1846
    %v1855 = vsub.f32 %v1829, %v1847
    %v1856 = vsub.f32 %v1830, %v1848
    %v1857 = vmul.f32 %v1853, 1.442695
    %v1858 = vpow.pop %v1857
    %v1859 = vmul.f32 %v1854, 1.442695
    %v1860 = vpow.pop %v1859
    %v1861 = vmul.f32 %v1855, 1.442695
    %v1862 = vpow.pop %v1861
    %v1863 = vmul.f32 %v1856, 1.442695
    %v1864 = vpow.pop %v1863
    %1866 = vset.pattern.permute.xlu0 0
    %1867 = vperm.xlu0 %1866, %v1858
    %v1868 = vpop.permute.xlu0 %1867
    %1871 = vset.pattern.permute.xlu0 0
    %1872 = vperm.xlu0 %1871, %v1860
    %v1873 = vpop.permute.xlu0 %1872
    %1876 = vset.pattern.permute.xlu0 0
    %1877 = vperm.xlu0 %1876, %v1862
    %v1878 = vpop.permute.xlu0 %1877
    %1881 = vset.pattern.permute.xlu0 0
    %1882 = vperm.xlu0 %1881, %v1864
    %v1883 = vpop.permute.xlu0 %1882
    %v1885 = vmul.f32 %v1868, %v790
    %v1886 = vmul.f32 %v1873, %v790
    %v1887 = vmul.f32 %v1878, %v790
    %v1888 = vmul.f32 %v1883, %v790
    %1889 = vset.pattern.permute.xlu0 1
    %1890 = vperm.xlu0 %1889, %v1858
    %v1891 = vpop.permute.xlu0 %1890
    %1893 = vset.pattern.permute.xlu0 1
    %1894 = vperm.xlu0 %1893, %v1860
    %v1895 = vpop.permute.xlu0 %1894
    %1897 = vset.pattern.permute.xlu0 1
    %1898 = vperm.xlu0 %1897, %v1862
    %v1899 = vpop.permute.xlu0 %1898
    %1901 = vset.pattern.permute.xlu0 1
    %1902 = vperm.xlu0 %1901, %v1864
    %v1903 = vpop.permute.xlu0 %1902
    %v1905 = vmul.f32 %v1891, %v811
    %v1906 = vmul.f32 %v1895, %v811
    %v1907 = vmul.f32 %v1899, %v811
    %v1908 = vmul.f32 %v1903, %v811
    %v1909 = vadd.f32 %v1885, %v1905
    %v1910 = vadd.f32 %v1886, %v1906
    %v1911 = vadd.f32 %v1887, %v1907
    %v1912 = vadd.f32 %v1888, %v1908
    %1913 = vset.pattern.permute.xlu0 2
    %1914 = vperm.xlu0 %1913, %v1858
    %v1915 = vpop.permute.xlu0 %1914
    %1917 = vset.pattern.permute.xlu0 2
    %1918 = vperm.xlu0 %1917, %v1860
    %v1919 = vpop.permute.xlu0 %1918
    %1921 = vset.pattern.permute.xlu0 2
    %1922 = vperm.xlu0 %1921, %v1862
    %v1923 = vpop.permute.xlu0 %1922
    %1925 = vset.pattern.permute.xlu0 2
    %1926 = vperm.xlu0 %1925, %v1864
    %v1927 = vpop.permute.xlu0 %1926
    %v1929 = vmul.f32 %v1915, %v836
    %v1930 = vmul.f32 %v1919, %v836
    %v1931 = vmul.f32 %v1923, %v836
    %v1932 = vmul.f32 %v1927, %v836
    %v1933 = vadd.f32 %v1909, %v1929
    %v1934 = vadd.f32 %v1910, %v1930
    %v1935 = vadd.f32 %v1911, %v1931
    %v1936 = vadd.f32 %v1912, %v1932
    %1937 = vset.pattern.permute.xlu0 3
    %1938 = vperm.xlu0 %1937, %v1858
    %v1939 = vpop.permute.xlu0 %1938
    %1941 = vset.pattern.permute.xlu0 3
    %1942 = vperm.xlu0 %1941, %v1860
    %v1943 = vpop.permute.xlu0 %1942
    %1945 = vset.pattern.permute.xlu0 3
    %1946 = vperm.xlu0 %1945, %v1862
    %v1947 = vpop.permute.xlu0 %1946
    %1949 = vset.pattern.permute.xlu0 3
    %1950 = vperm.xlu0 %1949, %v1864
    %v1951 = vpop.permute.xlu0 %1950
    %v1953 = vmul.f32 %v1939, %v861
    %v1954 = vmul.f32 %v1943, %v861
    %v1955 = vmul.f32 %v1947, %v861
    %v1956 = vmul.f32 %v1951, %v861
    %v1957 = vadd.f32 %v1933, %v1953
    %v1958 = vadd.f32 %v1934, %v1954
    %v1959 = vadd.f32 %v1935, %v1955
    %v1960 = vadd.f32 %v1936, %v1956
    %1961 = vset.pattern.permute.xlu0 4
    %1962 = vperm.xlu0 %1961, %v1858
    %v1963 = vpop.permute.xlu0 %1962
    %1965 = vset.pattern.permute.xlu0 4
    %1966 = vperm.xlu0 %1965, %v1860
    %v1967 = vpop.permute.xlu0 %1966
    %1969 = vset.pattern.permute.xlu0 4
    %1970 = vperm.xlu0 %1969, %v1862
    %v1971 = vpop.permute.xlu0 %1970
    %1973 = vset.pattern.permute.xlu0 4
    %1974 = vperm.xlu0 %1973, %v1864
    %v1975 = vpop.permute.xlu0 %1974
    %v1977 = vmul.f32 %v1963, %v886
    %v1978 = vmul.f32 %v1967, %v886
    %v1979 = vmul.f32 %v1971, %v886
    %v1980 = vmul.f32 %v1975, %v886
    %v1981 = vadd.f32 %v1957, %v1977
    %v1982 = vadd.f32 %v1958, %v1978
    %v1983 = vadd.f32 %v1959, %v1979
    %v1984 = vadd.f32 %v1960, %v1980
    %v1985 = vlog2.pop %v1981
    %v1986 = vmul.f32 %v1985, 0.6931472
    %v1987 = vlog2.pop %v1982
    %v1988 = vmul.f32 %v1987, 0.6931472
    %v1989 = vlog2.pop %v1983
    %v1990 = vmul.f32 %v1989, 0.6931472
    %v1991 = vlog2.pop %v1984
    %v1992 = vmul.f32 %v1991, 0.6931472
    %v1993 = vadd.f32 %v1986, %v1844
    %v1994 = vadd.f32 %v1988, %v1846
    %v1995 = vadd.f32 %v1990, %v1847
    %v1996 = vadd.f32 %v1992, %v1848
    %v1997 = vadd.f32 %v1993, %v732
    %v1998 = vadd.f32 %v1994, %v732
    %v1999 = vadd.f32 %v1995, %v732
    %v2000 = vadd.f32 %v1996, %v732
    %v2001 = vrot.slane %v499, 7
    %v2002 = vrot.slane %v505, 7
    %v2003 = vrot.slane %v508, 7
    %v2008 = vadd.f32 %v1997, %v2001
    %v2009 = vadd.f32 %v1998, %v740
    %v2010 = vadd.f32 %v1999, %v2002
    %v2011 = vadd.f32 %v2000, %v2003
    %v2016 = vrot.slane %v2009, 7
    %v2017 = vsel %vm703, %v2016, %v2008
    %v2018 = vrot.slane %v2010, 6
    %v2019 = vsel %vm706, %v2018, %v2017
    %v2020 = vrot.slane %v2011, 5
    %v2021 = vsel %vm709, %v2020, %v2019
    %v2023 = vsel %vm712, %v2021, -inf
    %2024 = vmax.xlane.f32.xlu0 %v2023
    %v2025 = vpop.xlane.xlu0 %2024
    %v2027 = vrot.slane %v2025, 1
    %v2028 = vrot.slane %v2025, 2
    %v2029 = vrot.slane %v2025, 3
    %v2034 = vsub.f32 %v2008, %v2025
    %v2035 = vsub.f32 %v2009, %v2027
    %v2036 = vsub.f32 %v2010, %v2028
    %v2037 = vsub.f32 %v2011, %v2029
    %v2038 = vmul.f32 %v2034, 1.442695
    %v2039 = vpow.pop %v2038
    %v2040 = vmul.f32 %v2035, 1.442695
    %v2041 = vpow.pop %v2040
    %v2042 = vmul.f32 %v2036, 1.442695
    %v2043 = vpow.pop %v2042
    %v2044 = vmul.f32 %v2037, 1.442695
    %v2045 = vpow.pop %v2044
    %v2050 = vrot.slane %v2041, 7
    %v2051 = vsel %vm703, %v2050, %v2039
    %v2052 = vrot.slane %v2043, 6
    %v2053 = vsel %vm706, %v2052, %v2051
    %v2054 = vrot.slane %v2045, 5
    %v2055 = vsel %vm709, %v2054, %v2053
    %v2057 = vsel %vm712, %v2055, 0.0
    %2058 = vadd.xlane.f32.xlu0 %v2057
    %v2059 = vpop.xlane.xlu0 %2058
    %v2060 = vlog2.pop %v2059
    %v2061 = vmul.f32 %v2060, 0.6931472
    %v2062 = vadd.f32 %v2061, %v2025
    %vm2063 = vcmask 3072
    %v2064 = vsel %vm2063, %v2062, 0.0
    %2065 = vadd.xlane.f32.xlu0 %v2064
    %v2066 = vpop.xlane.xlu0 %2065
    %v2067 = vrot.slane %v2066, 4
    %v2068 = vadd.f32 %v2066, %v2067
    %v2069 = vrot.slane %v2068, 2
    %v2070 = vadd.f32 %v2068, %v2069
    %v2071 = vrot.slane %v2070, 1
    %v2072 = vadd.f32 %v2070, %v2071
    %s2073 = vtos %v2072
    %v2074 = vstv %s2073
    %v2075 = vsub.f32 %v2074, %v724
    %v2076 = vmul.f32 %v2075, 4.0
    %vm2077 = vcmask 0
    %2078 = vst.msk [vmem:[#allocation8] sm:$0x1] %vm2077, %v2076
    // Predicated region
    $region50: #{tpu_custom_call.1} parent=1 // pred_check
      _
    $region51: #{tpu_custom_call.1} parent=1 // pred_check_branch
      %2080 = sbr.rel (0) target = $region53
    $region52: #{tpu_custom_call.1} parent=1 // pred_region
      %2082 = vsyncadd [#allocation4], 0
      %s2084 = sshll.u32 [#allocation8], 4
      %s2085 = int_to_ptr.vmem [resolvable:$true] %s2084
      %s2086 = sshll.u32 %s9, 4
      %s2087 = int_to_ptr.hbm [resolvable:$true] %s2086
      %2089 = dma.vmem_to_hbm [thread:$0]  %s2085, 16, %s2087, [#allocation4]
    $region53: #{tpu_custom_call.1} parent=1 // pred_fallthru
      _
    // Predicated region
    $region54: #{tpu_custom_call.1} parent=1 // pred_check
      _
    $region55: #{tpu_custom_call.1} parent=1 // pred_check_branch
      %2091 = sbr.rel (0) target = $region57
    $region56: #{tpu_custom_call.1} parent=1 // pred_region
      %2093 = dma.done [#allocation4], 16
    $region57: #{tpu_custom_call.1} parent=1 // pred_fallthru
      _
    %2094 = vsyncpa [#allocation3], 1
    %2095 = vsyncpa [#allocation6], 1
    %2096 = vsyncpa [#allocation4], 1

</llo_original>
